<compile_context>
chip_gen: v6e
topology: v6e:2x2x1
jax: 0.10.0
libtpu: 0.0.40
codegen_flags: <defaults>
</compile_context>

<pallas_src>
import math
from functools import partial

import jax
import jax.numpy as jnp
from jax import lax
from jax.experimental import pallas as pl
from jax.experimental.pallas import tpu as pltpu

LN_EPS = 1e-5
MATMUL_DTYPE = jnp.bfloat16            # MXU-native input dtype; accumulate f32
HIGHEST = jax.lax.Precision.HIGHEST    # used only by the pure-JAX reference


# ----------------------------------------------------------------------------
# Kernel
# ----------------------------------------------------------------------------
def _layer_norm(y, gamma, beta):
    # Two-pass (centered) variance: avoids the E[y^2]-mu^2 cancellation noted
    # in the review; rsqrt goes to the EUP.
    mu = jnp.mean(y, axis=-1, keepdims=True)
    d = y - mu
    var = jnp.mean(d * d, axis=-1, keepdims=True)
    return d * lax.rsqrt(var + LN_EPS) * gamma + beta


def make_fused_encoder_kernel(num_heads):
    """One (batch, layer) grid step: one encoder layer on one batch element.

    The activation lives in `act_ref` (VMEM scratch) across the layer axis.
    """

    def kernel(x_ref, pe_ref,
               qkv_w_ref, qkv_b_ref, fo_w_ref, fo_b_ref,
               ln1_g_ref, ln1_b_ref,
               fc1_w_ref, fc1_b_ref, fc2_w_ref, fc2_b_ref,
               ln2_g_ref, ln2_b_ref,
               norm_g_ref, norm_b_ref,
               o_ref, act_ref):
        S, E = x_ref.shape                     # batch/layer dims are Squeezed()
        H = num_heads
        hd = E // H
        scale = 1.0 / math.sqrt(hd)
        f32 = jnp.float32
        l = pl.program_id(1)

        # ---- layer 0: positional add initializes the carried activation ----
        @pl.when(l == 0)
        def _():
            act_ref[...] = x_ref[...] + pe_ref[...]

        x = act_ref[...]                       # (S, E) f32

        # ---- QKV: ONE lane-dense (S,E)@(E,3E) matmul (review item #1) ----
        qkv = jnp.dot(x.astype(MATMUL_DTYPE), qkv_w_ref[...],
                      preferred_element_type=f32) + qkv_b_ref[...]   # (S, 3E)

        # Column order of the torch qkv Linear is (3, H, hd) -> slice q/k/v,
        # then split heads (static slices + leading-dim stack, no reshape of
        # the lane dim, no (H,S,E) broadcast of x).
        def split_heads(m):                    # (S, E) -> (H, S, hd) bf16
            return jnp.stack(
                [m[:, h * hd:(h + 1) * hd] for h in range(H)], axis=0
            ).astype(MATMUL_DTYPE)

        q = split_heads(qkv[:, 0 * E:1 * E])
        k = split_heads(qkv[:, 1 * E:2 * E])
        v = split_heads(qkv[:, 2 * E:3 * E])

        # ---- attention scores + softmax (all heads batched) ----
        sc = lax.dot_general(q, k, (((2,), (2,)), ((0,), (0,))),
                             preferred_element_type=f32) * scale      # (H,S,S)
        sc = sc - jnp.max(sc, axis=-1, keepdims=True)
        ex = jnp.exp(sc)
        inv = pl.reciprocal(jnp.sum(ex, axis=-1, keepdims=True), approx=True)
        # torch.clamp(min=1e-6, max=1.0); bf16 cast folded into the same pass.
        p = jnp.clip(ex * inv, 1e-6, 1.0).astype(MATMUL_DTYPE)

        ctx = lax.dot_general(p, v, (((2,), (1,)), ((0,), (0,))),
                              preferred_element_type=f32)             # (H,S,hd)

        # ---- output projection with head merge ----
        # fo_w is (H, hd, E); per-head projection batched on the MXU, heads
        # merged with H slice-adds (see TODO at top re: single-dot merge).
        attn_h = lax.dot_general(ctx.astype(MATMUL_DTYPE), fo_w_ref[...],
                                 (((2,), (1,)), ((0,), (0,))),
                                 preferred_element_type=f32)          # (H,S,E)
        attn = fo_b_ref[...] + sum(attn_h[i] for i in range(H))       # (S, E)

        h1 = _layer_norm(x + attn, ln1_g_ref[...], ln1_b_ref[...])

        # ---- feed-forward (dropout = identity in eval) ----
        f = jnp.dot(h1.astype(MATMUL_DTYPE), fc1_w_ref[...],
                    preferred_element_type=f32) + fc1_b_ref[...]
        f = jnp.maximum(f, 0.0)
        f = jnp.dot(f.astype(MATMUL_DTYPE), fc2_w_ref[...],
                    preferred_element_type=f32) + fc2_b_ref[...]

        y = _layer_norm(h1 + f, ln2_g_ref[...], ln2_b_ref[...])
        act_ref[...] = y

        # ---- last layer: final LayerNorm + single lane-dense store ----
        @pl.when(l == pl.num_programs(1) - 1)
        def _():
            o_ref[...] = _layer_norm(y, norm_g_ref[...],
                                     norm_b_ref[...]).astype(o_ref.dtype)

    return kernel


# ----------------------------------------------------------------------------
# Host-side one-time weight packing (hoisted out of the jitted call path)
# ----------------------------------------------------------------------------
def pack_params(params, num_heads):
    """Stack per-layer weights on a leading layer axis, reshape fc_out per
    head, and cast matmul operands to bf16 (biases / LN params stay f32)."""
    layers = params["layers"]
    E = layers[0]["qkv_w"].shape[0]
    H = num_heads
    hd = E // H

    def per_layer(lp):
        return dict(
            qkv_w=lp["qkv_w"].astype(MATMUL_DTYPE),      # (E, 3E), cols (3,H,hd)
            qkv_b=lp["qkv_b"],                           # (1, 3E)
            fo_w=lp["fo_w"].reshape(H, hd, E).astype(MATMUL_DTYPE),
            fo_b=lp["fo_b"],
            ln1_g=lp["ln1_g"], ln1_b=lp["ln1_b"],
            fc1_w=lp["fc1_w"].astype(MATMUL_DTYPE), fc1_b=lp["fc1_b"],
            fc2_w=lp["fc2_w"].astype(MATMUL_DTYPE), fc2_b=lp["fc2_b"],
            ln2_g=lp["ln2_g"], ln2_b=lp["ln2_b"])

    per = [per_layer(lp) for lp in layers]
    packed = {k: jnp.stack([p[k] for p in per]) for k in per[0]}
    packed["norm_g"] = params["norm_g"]
    packed["norm_b"] = params["norm_b"]
    return jax.tree_util.tree_map(jnp.asarray, packed)


def positional_encoding(seq_len, embed_dim):
    # Matches the torch PositionalEncoding construction.
    position = jnp.arange(seq_len, dtype=jnp.float32)[:, None]
    div_term = jnp.exp(jnp.arange(0, embed_dim, 2, dtype=jnp.float32)
                       * (-math.log(10000.0) / embed_dim))
    pe = jnp.zeros((seq_len, embed_dim), dtype=jnp.float32)
    pe = pe.at[:, 0::2].set(jnp.sin(position * div_term))
    pe = pe.at[:, 1::2].set(jnp.cos(position * div_term))
    return pe                                            # (S, E)


# ----------------------------------------------------------------------------
# Wrapper
# ----------------------------------------------------------------------------
@partial(jax.jit, static_argnames=("num_heads",))
def adapted_transformer_encoder(x, packed, pe, *, num_heads):
    B, S, E = x.shape
    L = packed["qkv_w"].shape[0]

    inputs = [x, pe,
              packed["qkv_w"], packed["qkv_b"], packed["fo_w"], packed["fo_b"],
              packed["ln1_g"], packed["ln1_b"],
              packed["fc1_w"], packed["fc1_b"], packed["fc2_w"], packed["fc2_b"],
              packed["ln2_g"], packed["ln2_b"],
              packed["norm_g"], packed["norm_b"]]

    def layer_spec(a):
        # One layer's slice per grid step along the "arbitrary" layer axis;
        # Pallas double-buffers it -> next layer's weights prefetch for free.
        nd = a.ndim
        return pl.BlockSpec((pl.Squeezed(),) + a.shape[1:],
                            lambda b, l, _nd=nd: (l,) + (0,) * (_nd - 1))

    def const_spec(a):
        nd = a.ndim
        return pl.BlockSpec(a.shape, lambda b, l, _nd=nd: (0,) * _nd)

    act_spec = pl.BlockSpec((pl.Squeezed(), S, E), lambda b, l: (b, 0, 0))

    in_specs = ([act_spec, const_spec(pe)]
                + [layer_spec(a) for a in inputs[2:14]]
                + [const_spec(a) for a in inputs[14:]])

    return pl.pallas_call(
        make_fused_encoder_kernel(num_heads),
        out_shape=jax.ShapeDtypeStruct((B, S, E), jnp.float32),
        grid=(B, L),
        in_specs=in_specs,
        out_specs=pl.BlockSpec((pl.Squeezed(), S, E), lambda b, l: (b, 0, 0)),
        scratch_shapes=[pltpu.VMEM((S, E), jnp.float32)],   # activation carry
        compiler_params=pltpu.CompilerParams(
            # batch axis parallel (v7x megacore); layer axis is the carried /
            # streamed reduction-like axis.
            dimension_semantics=("parallel", "arbitrary"),
            vmem_limit_bytes=48 * 1024 * 1024,
        ),
    )(*inputs)


# ----------------------------------------------------------------------------
# Parameter init (deterministic, PyTorch-Linear-style uniform)
# ----------------------------------------------------------------------------
def _linear(key, fan_in, fan_out):
    k1, k2 = jax.random.split(key)
    bound = 1.0 / math.sqrt(fan_in)
    w = jax.random.uniform(k1, (fan_in, fan_out), jnp.float32, -bound, bound)
    b = jax.random.uniform(k2, (1, fan_out), jnp.float32, -bound, bound)
    return w, b


def init_params(key, embed_dim, hidden_dim, num_layers):
    layers = []
    for _ in range(num_layers):
        key, k1, k2, k3, k4, k5, k6 = jax.random.split(key, 7)
        qkv_w, qkv_b = _linear(k1, embed_dim, 3 * embed_dim)
        fo_w, fo_b = _linear(k2, embed_dim, embed_dim)
        fc1_w, fc1_b = _linear(k3, embed_dim, hidden_dim)
        fc2_w, fc2_b = _linear(k4, hidden_dim, embed_dim)
        ln1_g = 1.0 + 0.02 * jax.random.normal(k5, (1, embed_dim), jnp.float32)
        ln1_b = 0.02 * jax.random.normal(jax.random.fold_in(k5, 1), (1, embed_dim), jnp.float32)
        ln2_g = 1.0 + 0.02 * jax.random.normal(k6, (1, embed_dim), jnp.float32)
        ln2_b = 0.02 * jax.random.normal(jax.random.fold_in(k6, 1), (1, embed_dim), jnp.float32)
        layers.append(dict(qkv_w=qkv_w, qkv_b=qkv_b, fo_w=fo_w, fo_b=fo_b,
                           ln1_g=ln1_g, ln1_b=ln1_b,
                           fc1_w=fc1_w, fc1_b=fc1_b, fc2_w=fc2_w, fc2_b=fc2_b,
                           ln2_g=ln2_g, ln2_b=ln2_b))
    key, kg = jax.random.split(key)
    norm_g = 1.0 + 0.02 * jax.random.normal(kg, (1, embed_dim), jnp.float32)
    norm_b = 0.02 * jax.random.normal(jax.random.fold_in(kg, 1), (1, embed_dim), jnp.float32)
    return dict(layers=layers, norm_g=norm_g, norm_b=norm_b)


# ----------------------------------------------------------------------------
# Pure-JAX f32 reference (mirrors the PyTorch forward exactly)
# ----------------------------------------------------------------------------
def reference_forward(x, params, num_heads):
    def ln(y, g, b):
        mu = jnp.mean(y, axis=-1, keepdims=True)
        var = jnp.mean((y - mu) ** 2, axis=-1, keepdims=True)
        return (y - mu) / jnp.sqrt(var + LN_EPS) * g + b

    mm = partial(jnp.matmul, precision=HIGHEST)
    B, S, E = x.shape
    hd = E // num_heads
    x = x + positional_encoding(S, E)[None]
    for lp in params["layers"]:
        qkv = mm(x, lp["qkv_w"]) + lp["qkv_b"]
        qkv = qkv.reshape(B, S, 3, num_heads, hd).transpose(2, 0, 3, 1, 4)
        q, k, v = qkv[0], qkv[1], qkv[2]
        a = jnp.einsum("bhqd,bhkd->bhqk", q, k, precision=HIGHEST) / math.sqrt(hd)
        a = jax.nn.softmax(a, axis=-1)
        a = jnp.clip(a, 1e-6, 1.0)
        attn = jnp.einsum("bhqk,bhkd->bhqd", a, v, precision=HIGHEST)
        attn = attn.transpose(0, 2, 1, 3).reshape(B, S, E)
        attn = mm(attn, lp["fo_w"]) + lp["fo_b"]
        x = ln(x + attn, lp["ln1_g"], lp["ln1_b"])
        f = mm(jnp.maximum(mm(x, lp["fc1_w"]) + lp["fc1_b"], 0.0),
               lp["fc2_w"]) + lp["fc2_b"]
        x = ln(x + f, lp["ln2_g"], lp["ln2_b"])
    return ln(x, params["norm_g"], params["norm_b"])


# ----------------------------------------------------------------------------
if __name__ == "__main__":
    # Lane/sublane-aligned small config: E and hidden multiples of 128, S a
    # multiple of 8 -> lane-dense matmuls and an unmasked output store.
    EMBED_DIM, NUM_HEADS, HIDDEN_DIM, NUM_LAYERS = 128, 4, 256, 2
    BATCH, SEQ = 2, 16

    key = jax.random.PRNGKey(0)
    kx, kp = jax.random.split(key)
    x = jax.random.normal(kx, (BATCH, SEQ, EMBED_DIM), jnp.float32)
    params = init_params(kp, EMBED_DIM, HIDDEN_DIM, NUM_LAYERS)

    # One-time packing (outside the jitted per-call path).
    packed = jax.block_until_ready(pack_params(params, NUM_HEADS))
    pe = positional_encoding(SEQ, EMBED_DIM)

    out = adapted_transformer_encoder(x, packed, pe, num_heads=NUM_HEADS)
    out = jax.block_until_ready(out)

    ref = jax.block_until_ready(reference_forward(x, params, NUM_HEADS))
    assert out.shape == (BATCH, SEQ, EMBED_DIM)
    # Kernel feeds bf16 into the MXU (f32 accumulate) and uses an approx
    # reciprocal in softmax vs. an f32-HIGHEST reference -> allow a few 1e-2
    # of drift across the 2 layers + LayerNorms.
    assert jnp.allclose(out, ref, atol=5e-2, rtol=5e-2), "mismatch vs JAX reference"

    print("KERNEL_OK")
</pallas_src>

<mosaic_0001>
module attributes {stable_mosaic.version = 11 : i64} {
  func.func @kernel(%arg0: i32, %arg1: i32, %arg2: memref<1x16x128xf32, #tpu.memory_space<vmem>>, %arg3: memref<16x128xf32, #tpu.memory_space<vmem>>, %arg4: memref<1x128x384xbf16, #tpu.memory_space<vmem>>, %arg5: memref<1x1x384xf32, #tpu.memory_space<vmem>>, %arg6: memref<1x4x32x128xbf16, #tpu.memory_space<vmem>>, %arg7: memref<1x1x128xf32, #tpu.memory_space<vmem>>, %arg8: memref<1x1x128xf32, #tpu.memory_space<vmem>>, %arg9: memref<1x1x128xf32, #tpu.memory_space<vmem>>, %arg10: memref<1x128x256xbf16, #tpu.memory_space<vmem>>, %arg11: memref<1x1x256xf32, #tpu.memory_space<vmem>>, %arg12: memref<1x256x128xbf16, #tpu.memory_space<vmem>>, %arg13: memref<1x1x128xf32, #tpu.memory_space<vmem>>, %arg14: memref<1x1x128xf32, #tpu.memory_space<vmem>>, %arg15: memref<1x1x128xf32, #tpu.memory_space<vmem>>, %arg16: memref<1x128xf32, #tpu.memory_space<vmem>>, %arg17: memref<1x128xf32, #tpu.memory_space<vmem>>, %arg18: memref<1x16x128xf32, #tpu.memory_space<vmem>>, %arg19: memref<16x128xf32, #tpu.memory_space<vmem>>) attributes {dimension_semantics = [#tpu.dimension_semantics<parallel>, #tpu.dimension_semantics<arbitrary>], iteration_bounds = array<i64: 2, 2>, scalar_prefetch = 0 : i64, scratch_operands = 1 : i64, tpu.core_type = #tpu.core_type<tc>, window_params = [{transform_indices = @transform_0, window_bounds = array<i64: 1, 16, 128>}, {pipeline_mode = #tpu.pipeline_mode<synchronous>, transform_indices = @transform_1, window_bounds = array<i64: 16, 128>}, {transform_indices = @transform_2, window_bounds = array<i64: 1, 128, 384>}, {transform_indices = @transform_3, window_bounds = array<i64: 1, 1, 384>}, {transform_indices = @transform_4, window_bounds = array<i64: 1, 4, 32, 128>}, {transform_indices = @transform_5, window_bounds = array<i64: 1, 1, 128>}, {transform_indices = @transform_6, window_bounds = array<i64: 1, 1, 128>}, {transform_indices = @transform_7, window_bounds = array<i64: 1, 1, 128>}, {transform_indices = @transform_8, window_bounds = array<i64: 1, 128, 256>}, {transform_indices = @transform_9, window_bounds = array<i64: 1, 1, 256>}, {transform_indices = @transform_10, window_bounds = array<i64: 1, 256, 128>}, {transform_indices = @transform_11, window_bounds = array<i64: 1, 1, 128>}, {transform_indices = @transform_12, window_bounds = array<i64: 1, 1, 128>}, {transform_indices = @transform_13, window_bounds = array<i64: 1, 1, 128>}, {pipeline_mode = #tpu.pipeline_mode<synchronous>, transform_indices = @transform_14, window_bounds = array<i64: 1, 128>}, {pipeline_mode = #tpu.pipeline_mode<synchronous>, transform_indices = @transform_15, window_bounds = array<i64: 1, 128>}, {transform_indices = @transform_16, window_bounds = array<i64: 1, 16, 128>}]} {
    %c0_i32 = arith.constant 0 : i32
    %0 = arith.cmpi eq, %arg1, %c0_i32 : i32
    %1 = arith.extui %0 : i1 to i32
    %c0_i32_0 = arith.constant 0 : i32
    %2 = arith.cmpi ne, %1, %c0_i32_0 : i32
    scf.if %2 {
      %c0_64 = arith.constant 0 : index
      %c0_65 = arith.constant 0 : index
      %c0_66 = arith.constant 0 : index
      %157 = vector.load %arg2[%c0_64, %c0_65, %c0_66] : memref<1x16x128xf32, #tpu.memory_space<vmem>>, vector<1x16x128xf32>
      %158 = vector.shape_cast %157 : vector<1x16x128xf32> to vector<16x128xf32>
      %c0_67 = arith.constant 0 : index
      %c0_68 = arith.constant 0 : index
      %159 = vector.load %arg3[%c0_67, %c0_68] : memref<16x128xf32, #tpu.memory_space<vmem>>, vector<16x128xf32>
      %160 = arith.addf %158, %159 : vector<16x128xf32>
      %c0_69 = arith.constant 0 : index
      %c0_70 = arith.constant 0 : index
      %161 = vector.load %arg19[%c0_69, %c0_70] : memref<16x128xf32, #tpu.memory_space<vmem>>, vector<16x128xf32>
      tpu.vector_store %arg19[%c0_69, %c0_70], %160 {strides = array<i32>} : memref<16x128xf32, #tpu.memory_space<vmem>>, vector<16x128xf32>,
    } else {
    }
    %c0 = arith.constant 0 : index
    %c0_1 = arith.constant 0 : index
    %3 = vector.load %arg19[%c0, %c0_1] : memref<16x128xf32, #tpu.memory_space<vmem>>, vector<16x128xf32>
    %4 = arith.truncf %3 : vector<16x128xf32> to vector<16x128xbf16>
    %c0_2 = arith.constant 0 : index
    %c0_3 = arith.constant 0 : index
    %c0_4 = arith.constant 0 : index
    %5 = vector.load %arg4[%c0_2, %c0_3, %c0_4] : memref<1x128x384xbf16, #tpu.memory_space<vmem>>, vector<1x128x384xbf16>
    %6 = vector.shape_cast %5 : vector<1x128x384xbf16> to vector<128x384xbf16>
    %cst = arith.constant dense<0.000000e+00> : vector<16x384xf32>
    %7 = tpu.matmul %4, %6, %cst {dimension_numbers = #tpu.dot_dimension_numbers<[1], [0], [0], [1], [0, 0, 1, 1], [], []>} : vector<16x128xbf16>, vector<128x384xbf16>, vector<16x384xf32> -> vector<16x384xf32>
    %c0_5 = arith.constant 0 : index
    %c0_6 = arith.constant 0 : index
    %c0_7 = arith.constant 0 : index
    %8 = vector.load %arg5[%c0_5, %c0_6, %c0_7] : memref<1x1x384xf32, #tpu.memory_space<vmem>>, vector<1x1x384xf32>
    %9 = vector.shape_cast %8 : vector<1x1x384xf32> to vector<1x384xf32>
    %10 = vector.broadcast %9 : vector<1x384xf32> to vector<16x384xf32>
    %11 = arith.addf %7, %10 : vector<16x384xf32>
    %12 = vector.extract_strided_slice %11 {offsets = [0, 0], sizes = [16, 128], strides = [1, 1]} : vector<16x384xf32> to vector<16x128xf32>
    %13 = vector.extract_strided_slice %12 {offsets = [0, 0], sizes = [16, 32], strides = [1, 1]} : vector<16x128xf32> to vector<16x32xf32>
    %14 = vector.extract_strided_slice %12 {offsets = [0, 32], sizes = [16, 32], strides = [1, 1]} : vector<16x128xf32> to vector<16x32xf32>
    %15 = vector.extract_strided_slice %12 {offsets = [0, 64], sizes = [16, 32], strides = [1, 1]} : vector<16x128xf32> to vector<16x32xf32>
    %16 = vector.extract_strided_slice %12 {offsets = [0, 96], sizes = [16, 32], strides = [1, 1]} : vector<16x128xf32> to vector<16x32xf32>
    %17 = vector.shape_cast %13 : vector<16x32xf32> to vector<1x16x32xf32>
    %18 = vector.shape_cast %14 : vector<16x32xf32> to vector<1x16x32xf32>
    %19 = vector.shape_cast %15 : vector<16x32xf32> to vector<1x16x32xf32>
    %20 = vector.shape_cast %16 : vector<16x32xf32> to vector<1x16x32xf32>
    %21 = tpu.concatenate %17, %18, %19, %20 in 0 : vector<1x16x32xf32>, vector<1x16x32xf32>, vector<1x16x32xf32>, vector<1x16x32xf32> -> vector<4x16x32xf32>
    %22 = arith.truncf %21 : vector<4x16x32xf32> to vector<4x16x32xbf16>
    %23 = vector.extract_strided_slice %11 {offsets = [0, 128], sizes = [16, 128], strides = [1, 1]} : vector<16x384xf32> to vector<16x128xf32>
    %24 = vector.extract_strided_slice %23 {offsets = [0, 0], sizes = [16, 32], strides = [1, 1]} : vector<16x128xf32> to vector<16x32xf32>
    %25 = vector.extract_strided_slice %23 {offsets = [0, 32], sizes = [16, 32], strides = [1, 1]} : vector<16x128xf32> to vector<16x32xf32>
    %26 = vector.extract_strided_slice %23 {offsets = [0, 64], sizes = [16, 32], strides = [1, 1]} : vector<16x128xf32> to vector<16x32xf32>
    %27 = vector.extract_strided_slice %23 {offsets = [0, 96], sizes = [16, 32], strides = [1, 1]} : vector<16x128xf32> to vector<16x32xf32>
    %28 = vector.shape_cast %24 : vector<16x32xf32> to vector<1x16x32xf32>
    %29 = vector.shape_cast %25 : vector<16x32xf32> to vector<1x16x32xf32>
    %30 = vector.shape_cast %26 : vector<16x32xf32> to vector<1x16x32xf32>
    %31 = vector.shape_cast %27 : vector<16x32xf32> to vector<1x16x32xf32>
    %32 = tpu.concatenate %28, %29, %30, %31 in 0 : vector<1x16x32xf32>, vector<1x16x32xf32>, vector<1x16x32xf32>, vector<1x16x32xf32> -> vector<4x16x32xf32>
    %33 = arith.truncf %32 : vector<4x16x32xf32> to vector<4x16x32xbf16>
    %34 = vector.extract_strided_slice %11 {offsets = [0, 256], sizes = [16, 128], strides = [1, 1]} : vector<16x384xf32> to vector<16x128xf32>
    %35 = vector.extract_strided_slice %34 {offsets = [0, 0], sizes = [16, 32], strides = [1, 1]} : vector<16x128xf32> to vector<16x32xf32>
    %36 = vector.extract_strided_slice %34 {offsets = [0, 32], sizes = [16, 32], strides = [1, 1]} : vector<16x128xf32> to vector<16x32xf32>
    %37 = vector.extract_strided_slice %34 {offsets = [0, 64], sizes = [16, 32], strides = [1, 1]} : vector<16x128xf32> to vector<16x32xf32>
    %38 = vector.extract_strided_slice %34 {offsets = [0, 96], sizes = [16, 32], strides = [1, 1]} : vector<16x128xf32> to vector<16x32xf32>
    %39 = vector.shape_cast %35 : vector<16x32xf32> to vector<1x16x32xf32>
    %40 = vector.shape_cast %36 : vector<16x32xf32> to vector<1x16x32xf32>
    %41 = vector.shape_cast %37 : vector<16x32xf32> to vector<1x16x32xf32>
    %42 = vector.shape_cast %38 : vector<16x32xf32> to vector<1x16x32xf32>
    %43 = tpu.concatenate %39, %40, %41, %42 in 0 : vector<1x16x32xf32>, vector<1x16x32xf32>, vector<1x16x32xf32>, vector<1x16x32xf32> -> vector<4x16x32xf32>
    %44 = arith.truncf %43 : vector<4x16x32xf32> to vector<4x16x32xbf16>
    %cst_8 = arith.constant dense<0.000000e+00> : vector<4x16x16xf32>
    %45 = tpu.matmul %22, %33, %cst_8 {dimension_numbers = #tpu.dot_dimension_numbers<[2], [2], [1], [1], [0, 0, 0, 1, 1, 1], [0], [0]>} : vector<4x16x32xbf16>, vector<4x16x32xbf16>, vector<4x16x16xf32> -> vector<4x16x16xf32>
    %cst_9 = arith.constant 0.176776692 : f32
    %46 = vector.broadcast %cst_9 : f32 to vector<4x16x16xf32>
    %47 = arith.mulf %45, %46 : vector<4x16x16xf32>
    %cst_10 = arith.constant dense<0xFF800000> : vector<4x16xf32>
    %48 = vector.multi_reduction <maximumf>, %47, %cst_10 [2] : vector<4x16x16xf32> to vector<4x16xf32>
    %49 = vector.shape_cast %48 : vector<4x16xf32> to vector<4x16x1xf32>
    %50 = vector.broadcast %49 : vector<4x16x1xf32> to vector<4x16x16xf32>
    %51 = arith.subf %47, %50 : vector<4x16x16xf32>
    %52 = math.exp %51 : vector<4x16x16xf32>
    %cst_11 = arith.constant dense<0.000000e+00> : vector<4x16xf32>
    %53 = vector.multi_reduction <add>, %52, %cst_11 [2] : vector<4x16x16xf32> to vector<4x16xf32>
    %54 = vector.shape_cast %53 : vector<4x16xf32> to vector<4x16x1xf32>
    %55 = tpu.reciprocal %54 {approx = true} : vector<4x16x1xf32> -> vector<4x16x1xf32>
    %56 = vector.broadcast %55 : vector<4x16x1xf32> to vector<4x16x16xf32>
    %57 = arith.mulf %52, %56 : vector<4x16x16xf32>
    %cst_12 = arith.constant 9.99999997E-7 : f32
    %cst_13 = arith.constant 1.000000e+00 : f32
    %58 = vector.broadcast %cst_12 : f32 to vector<4x16x16xf32>
    %59 = arith.maximumf %58, %57 : vector<4x16x16xf32>
    %60 = vector.broadcast %cst_13 : f32 to vector<4x16x16xf32>
    %61 = arith.minimumf %60, %59 : vector<4x16x16xf32>
    %62 = arith.truncf %61 : vector<4x16x16xf32> to vector<4x16x16xbf16>
    %cst_14 = arith.constant dense<0.000000e+00> : vector<4x16x32xf32>
    %63 = tpu.matmul %62, %44, %cst_14 {dimension_numbers = #tpu.dot_dimension_numbers<[2], [1], [1], [2], [0, 0, 0, 1, 1, 2], [0], [0]>} : vector<4x16x16xbf16>, vector<4x16x32xbf16>, vector<4x16x32xf32> -> vector<4x16x32xf32>
    %64 = arith.truncf %63 : vector<4x16x32xf32> to vector<4x16x32xbf16>
    %c0_15 = arith.constant 0 : index
    %c0_16 = arith.constant 0 : index
    %c0_17 = arith.constant 0 : index
    %c0_18 = arith.constant 0 : index
    %65 = vector.load %arg6[%c0_15, %c0_16, %c0_17, %c0_18] : memref<1x4x32x128xbf16, #tpu.memory_space<vmem>>, vector<1x4x32x128xbf16>
    %66 = vector.shape_cast %65 : vector<1x4x32x128xbf16> to vector<4x32x128xbf16>
    %cst_19 = arith.constant dense<0.000000e+00> : vector<4x16x128xf32>
    %67 = tpu.matmul %64, %66, %cst_19 {dimension_numbers = #tpu.dot_dimension_numbers<[2], [1], [1], [2], [0, 0, 0, 1, 1, 2], [0], [0]>} : vector<4x16x32xbf16>, vector<4x32x128xbf16>, vector<4x16x128xf32> -> vector<4x16x128xf32>
    %c0_20 = arith.constant 0 : index
    %c0_21 = arith.constant 0 : index
    %c0_22 = arith.constant 0 : index
    %68 = vector.load %arg7[%c0_20, %c0_21, %c0_22] : memref<1x1x128xf32, #tpu.memory_space<vmem>>, vector<1x1x128xf32>
    %69 = vector.shape_cast %68 : vector<1x1x128xf32> to vector<1x128xf32>
    %70 = vector.extract_strided_slice %67 {offsets = [0, 0, 0], sizes = [1, 16, 128], strides = [1, 1, 1]} : vector<4x16x128xf32> to vector<1x16x128xf32>
    %71 = vector.shape_cast %70 : vector<1x16x128xf32> to vector<16x128xf32>
    %cst_23 = arith.constant 0.000000e+00 : f32
    %72 = vector.broadcast %cst_23 : f32 to vector<16x128xf32>
    %73 = arith.addf %72, %71 : vector<16x128xf32>
    %74 = vector.extract_strided_slice %67 {offsets = [1, 0, 0], sizes = [1, 16, 128], strides = [1, 1, 1]} : vector<4x16x128xf32> to vector<1x16x128xf32>
    %75 = vector.shape_cast %74 : vector<1x16x128xf32> to vector<16x128xf32>
    %76 = arith.addf %73, %75 : vector<16x128xf32>
    %77 = vector.extract_strided_slice %67 {offsets = [2, 0, 0], sizes = [1, 16, 128], strides = [1, 1, 1]} : vector<4x16x128xf32> to vector<1x16x128xf32>
    %78 = vector.shape_cast %77 : vector<1x16x128xf32> to vector<16x128xf32>
    %79 = arith.addf %76, %78 : vector<16x128xf32>
    %80 = vector.extract_strided_slice %67 {offsets = [3, 0, 0], sizes = [1, 16, 128], strides = [1, 1, 1]} : vector<4x16x128xf32> to vector<1x16x128xf32>
    %81 = vector.shape_cast %80 : vector<1x16x128xf32> to vector<16x128xf32>
    %82 = arith.addf %79, %81 : vector<16x128xf32>
    %83 = vector.broadcast %69 : vector<1x128xf32> to vector<16x128xf32>
    %84 = arith.addf %83, %82 : vector<16x128xf32>
    %85 = arith.addf %3, %84 : vector<16x128xf32>
    %c0_24 = arith.constant 0 : index
    %c0_25 = arith.constant 0 : index
    %c0_26 = arith.constant 0 : index
    %86 = vector.load %arg8[%c0_24, %c0_25, %c0_26] : memref<1x1x128xf32, #tpu.memory_space<vmem>>, vector<1x1x128xf32>
    %87 = vector.shape_cast %86 : vector<1x1x128xf32> to vector<1x128xf32>
    %c0_27 = arith.constant 0 : index
    %c0_28 = arith.constant 0 : index
    %c0_29 = arith.constant 0 : index
    %88 = vector.load %arg9[%c0_27, %c0_28, %c0_29] : memref<1x1x128xf32, #tpu.memory_space<vmem>>, vector<1x1x128xf32>
    %89 = vector.shape_cast %88 : vector<1x1x128xf32> to vector<1x128xf32>
    %cst_30 = arith.constant dense<0.000000e+00> : vector<16xf32>
    %90 = vector.multi_reduction <add>, %85, %cst_30 [1] : vector<16x128xf32> to vector<16xf32>
    %91 = vector.shape_cast %90 : vector<16xf32> to vector<16x1xf32>
    %cst_31 = arith.constant 1.280000e+02 : f32
    %92 = vector.broadcast %cst_31 : f32 to vector<16x1xf32>
    %93 = arith.divf %91, %92 : vector<16x1xf32>
    %94 = vector.broadcast %93 : vector<16x1xf32> to vector<16x128xf32>
    %95 = arith.subf %85, %94 : vector<16x128xf32>
    %96 = arith.mulf %95, %95 : vector<16x128xf32>
    %cst_32 = arith.constant dense<0.000000e+00> : vector<16xf32>
    %97 = vector.multi_reduction <add>, %96, %cst_32 [1] : vector<16x128xf32> to vector<16xf32>
    %98 = vector.shape_cast %97 : vector<16xf32> to vector<16x1xf32>
    %cst_33 = arith.constant 1.280000e+02 : f32
    %99 = vector.broadcast %cst_33 : f32 to vector<16x1xf32>
    %100 = arith.divf %98, %99 : vector<16x1xf32>
    %cst_34 = arith.constant 9.99999974E-6 : f32
    %101 = vector.broadcast %cst_34 : f32 to vector<16x1xf32>
    %102 = arith.addf %100, %101 : vector<16x1xf32>
    %103 = math.rsqrt %102 : vector<16x1xf32>
    %104 = vector.broadcast %103 : vector<16x1xf32> to vector<16x128xf32>
    %105 = arith.mulf %95, %104 : vector<16x128xf32>
    %106 = vector.broadcast %87 : vector<1x128xf32> to vector<16x128xf32>
    %107 = arith.mulf %105, %106 : vector<16x128xf32>
    %108 = vector.broadcast %89 : vector<1x128xf32> to vector<16x128xf32>
    %109 = arith.addf %107, %108 : vector<16x128xf32>
    %110 = arith.truncf %109 : vector<16x128xf32> to vector<16x128xbf16>
    %c0_35 = arith.constant 0 : index
    %c0_36 = arith.constant 0 : index
    %c0_37 = arith.constant 0 : index
    %111 = vector.load %arg10[%c0_35, %c0_36, %c0_37] : memref<1x128x256xbf16, #tpu.memory_space<vmem>>, vector<1x128x256xbf16>
    %112 = vector.shape_cast %111 : vector<1x128x256xbf16> to vector<128x256xbf16>
    %cst_38 = arith.constant dense<0.000000e+00> : vector<16x256xf32>
    %113 = tpu.matmul %110, %112, %cst_38 {dimension_numbers = #tpu.dot_dimension_numbers<[1], [0], [0], [1], [0, 0, 1, 1], [], []>} : vector<16x128xbf16>, vector<128x256xbf16>, vector<16x256xf32> -> vector<16x256xf32>
    %c0_39 = arith.constant 0 : index
    %c0_40 = arith.constant 0 : index
    %c0_41 = arith.constant 0 : index
    %114 = vector.load %arg11[%c0_39, %c0_40, %c0_41] : memref<1x1x256xf32, #tpu.memory_space<vmem>>, vector<1x1x256xf32>
    %115 = vector.shape_cast %114 : vector<1x1x256xf32> to vector<1x256xf32>
    %116 = vector.broadcast %115 : vector<1x256xf32> to vector<16x256xf32>
    %117 = arith.addf %113, %116 : vector<16x256xf32>
    %cst_42 = arith.constant 0.000000e+00 : f32
    %118 = vector.broadcast %cst_42 : f32 to vector<16x256xf32>
    %119 = arith.maximumf %117, %118 : vector<16x256xf32>
    %120 = arith.truncf %119 : vector<16x256xf32> to vector<16x256xbf16>
    %c0_43 = arith.constant 0 : index
    %c0_44 = arith.constant 0 : index
    %c0_45 = arith.constant 0 : index
    %121 = vector.load %arg12[%c0_43, %c0_44, %c0_45] : memref<1x256x128xbf16, #tpu.memory_space<vmem>>, vector<1x256x128xbf16>
    %122 = vector.shape_cast %121 : vector<1x256x128xbf16> to vector<256x128xbf16>
    %cst_46 = arith.constant dense<0.000000e+00> : vector<16x128xf32>
    %123 = tpu.matmul %120, %122, %cst_46 {dimension_numbers = #tpu.dot_dimension_numbers<[1], [0], [0], [1], [0, 0, 1, 1], [], []>} : vector<16x256xbf16>, vector<256x128xbf16>, vector<16x128xf32> -> vector<16x128xf32>
    %c0_47 = arith.constant 0 : index
    %c0_48 = arith.constant 0 : index
    %c0_49 = arith.constant 0 : index
    %124 = vector.load %arg13[%c0_47, %c0_48, %c0_49] : memref<1x1x128xf32, #tpu.memory_space<vmem>>, vector<1x1x128xf32>
    %125 = vector.shape_cast %124 : vector<1x1x128xf32> to vector<1x128xf32>
    %126 = vector.broadcast %125 : vector<1x128xf32> to vector<16x128xf32>
    %127 = arith.addf %123, %126 : vector<16x128xf32>
    %128 = arith.addf %109, %127 : vector<16x128xf32>
    %c0_50 = arith.constant 0 : index
    %c0_51 = arith.constant 0 : index
    %c0_52 = arith.constant 0 : index
    %129 = vector.load %arg14[%c0_50, %c0_51, %c0_52] : memref<1x1x128xf32, #tpu.memory_space<vmem>>, vector<1x1x128xf32>
    %130 = vector.shape_cast %129 : vector<1x1x128xf32> to vector<1x128xf32>
    %c0_53 = arith.constant 0 : index
    %c0_54 = arith.constant 0 : index
    %c0_55 = arith.constant 0 : index
    %131 = vector.load %arg15[%c0_53, %c0_54, %c0_55] : memref<1x1x128xf32, #tpu.memory_space<vmem>>, vector<1x1x128xf32>
    %132 = vector.shape_cast %131 : vector<1x1x128xf32> to vector<1x128xf32>
    %cst_56 = arith.constant dense<0.000000e+00> : vector<16xf32>
    %133 = vector.multi_reduction <add>, %128, %cst_56 [1] : vector<16x128xf32> to vector<16xf32>
    %134 = vector.shape_cast %133 : vector<16xf32> to vector<16x1xf32>
    %cst_57 = arith.constant 1.280000e+02 : f32
    %135 = vector.broadcast %cst_57 : f32 to vector<16x1xf32>
    %136 = arith.divf %134, %135 : vector<16x1xf32>
    %137 = vector.broadcast %136 : vector<16x1xf32> to vector<16x128xf32>
    %138 = arith.subf %128, %137 : vector<16x128xf32>
    %139 = arith.mulf %138, %138 : vector<16x128xf32>
    %cst_58 = arith.constant dense<0.000000e+00> : vector<16xf32>
    %140 = vector.multi_reduction <add>, %139, %cst_58 [1] : vector<16x128xf32> to vector<16xf32>
    %141 = vector.shape_cast %140 : vector<16xf32> to vector<16x1xf32>
    %cst_59 = arith.constant 1.280000e+02 : f32
    %142 = vector.broadcast %cst_59 : f32 to vector<16x1xf32>
    %143 = arith.divf %141, %142 : vector<16x1xf32>
    %cst_60 = arith.constant 9.99999974E-6 : f32
    %144 = vector.broadcast %cst_60 : f32 to vector<16x1xf32>
    %145 = arith.addf %143, %144 : vector<16x1xf32>
    %146 = math.rsqrt %145 : vector<16x1xf32>
    %147 = vector.broadcast %146 : vector<16x1xf32> to vector<16x128xf32>
    %148 = arith.mulf %138, %147 : vector<16x128xf32>
    %149 = vector.broadcast %130 : vector<1x128xf32> to vector<16x128xf32>
    %150 = arith.mulf %148, %149 : vector<16x128xf32>
    %151 = vector.broadcast %132 : vector<1x128xf32> to vector<16x128xf32>
    %152 = arith.addf %150, %151 : vector<16x128xf32>
    %c0_61 = arith.constant 0 : index
    %c0_62 = arith.constant 0 : index
    %153 = vector.load %arg19[%c0_61, %c0_62] : memref<16x128xf32, #tpu.memory_space<vmem>>, vector<16x128xf32>
    tpu.vector_store %arg19[%c0_61, %c0_62], %152 {strides = array<i32>} : memref<16x128xf32, #tpu.memory_space<vmem>>, vector<16x128xf32>,
    %c1_i32 = arith.constant 1 : i32
    %154 = arith.cmpi eq, %arg1, %c1_i32 : i32
    %155 = arith.extui %154 : i1 to i32
    %c0_i32_63 = arith.constant 0 : i32
    %156 = arith.cmpi ne, %155, %c0_i32_63 : i32
    scf.if %156 {
      %c0_64 = arith.constant 0 : index
      %c0_65 = arith.constant 0 : index
      %157 = vector.load %arg16[%c0_64, %c0_65] : memref<1x128xf32, #tpu.memory_space<vmem>>, vector<1x128xf32>
      %c0_66 = arith.constant 0 : index
      %c0_67 = arith.constant 0 : index
      %158 = vector.load %arg17[%c0_66, %c0_67] : memref<1x128xf32, #tpu.memory_space<vmem>>, vector<1x128xf32>
      %cst_68 = arith.constant dense<0.000000e+00> : vector<16xf32>
      %159 = vector.multi_reduction <add>, %152, %cst_68 [1] : vector<16x128xf32> to vector<16xf32>
      %160 = vector.shape_cast %159 : vector<16xf32> to vector<16x1xf32>
      %cst_69 = arith.constant 1.280000e+02 : f32
      %161 = vector.broadcast %cst_69 : f32 to vector<16x1xf32>
      %162 = arith.divf %160, %161 : vector<16x1xf32>
      %163 = vector.broadcast %162 : vector<16x1xf32> to vector<16x128xf32>
      %164 = arith.subf %152, %163 : vector<16x128xf32>
      %165 = arith.mulf %164, %164 : vector<16x128xf32>
      %cst_70 = arith.constant dense<0.000000e+00> : vector<16xf32>
      %166 = vector.multi_reduction <add>, %165, %cst_70 [1] : vector<16x128xf32> to vector<16xf32>
      %167 = vector.shape_cast %166 : vector<16xf32> to vector<16x1xf32>
      %cst_71 = arith.constant 1.280000e+02 : f32
      %168 = vector.broadcast %cst_71 : f32 to vector<16x1xf32>
      %169 = arith.divf %167, %168 : vector<16x1xf32>
      %cst_72 = arith.constant 9.99999974E-6 : f32
      %170 = vector.broadcast %cst_72 : f32 to vector<16x1xf32>
      %171 = arith.addf %169, %170 : vector<16x1xf32>
      %172 = math.rsqrt %171 : vector<16x1xf32>
      %173 = vector.broadcast %172 : vector<16x1xf32> to vector<16x128xf32>
      %174 = arith.mulf %164, %173 : vector<16x128xf32>
      %175 = vector.broadcast %157 : vector<1x128xf32> to vector<16x128xf32>
      %176 = arith.mulf %174, %175 : vector<16x128xf32>
      %177 = vector.broadcast %158 : vector<1x128xf32> to vector<16x128xf32>
      %178 = arith.addf %176, %177 : vector<16x128xf32>
      %c0_73 = arith.constant 0 : index
      %c0_74 = arith.constant 0 : index
      %c0_75 = arith.constant 0 : index
      %179 = vector.load %arg18[%c0_73, %c0_74, %c0_75] : memref<1x16x128xf32, #tpu.memory_space<vmem>>, vector<1x16x128xf32>
      %180 = vector.shape_cast %179 : vector<1x16x128xf32> to vector<16x128xf32>
      %181 = vector.shape_cast %178 : vector<16x128xf32> to vector<1x16x128xf32>
      tpu.vector_store %arg18[%c0_73, %c0_74, %c0_75], %181 {strides = array<i32>} : memref<1x16x128xf32, #tpu.memory_space<vmem>>, vector<1x16x128xf32>,
    } else {
    }
    return
  }
  func.func @transform_0(%arg0: i32, %arg1: i32) -> (i32, i32, i32) {
    %c0_i32 = arith.constant 0 : i32
    %c0_i32_0 = arith.constant 0 : i32
    %c0_i32_1 = arith.constant 0 : i32
    return %arg0, %c0_i32, %c0_i32_0 : i32, i32, i32
  }
  func.func @transform_1(%arg0: i32, %arg1: i32) -> (i32, i32) {
    %c0_i32 = arith.constant 0 : i32
    %c0_i32_0 = arith.constant 0 : i32
    %c0_i32_1 = arith.constant 0 : i32
    return %c0_i32, %c0_i32_0 : i32, i32
  }
  func.func @transform_2(%arg0: i32, %arg1: i32) -> (i32, i32, i32) {
    %c0_i32 = arith.constant 0 : i32
    %c0_i32_0 = arith.constant 0 : i32
    %c0_i32_1 = arith.constant 0 : i32
    return %arg1, %c0_i32, %c0_i32_0 : i32, i32, i32
  }
  func.func @transform_3(%arg0: i32, %arg1: i32) -> (i32, i32, i32) {
    %c0_i32 = arith.constant 0 : i32
    %c0_i32_0 = arith.constant 0 : i32
    %c0_i32_1 = arith.constant 0 : i32
    return %arg1, %c0_i32, %c0_i32_0 : i32, i32, i32
  }
  func.func @transform_4(%arg0: i32, %arg1: i32) -> (i32, i32, i32, i32) {
    %c0_i32 = arith.constant 0 : i32
    %c0_i32_0 = arith.constant 0 : i32
    %c0_i32_1 = arith.constant 0 : i32
    %c0_i32_2 = arith.constant 0 : i32
    return %arg1, %c0_i32, %c0_i32_0, %c0_i32_1 : i32, i32, i32, i32
  }
  func.func @transform_5(%arg0: i32, %arg1: i32) -> (i32, i32, i32) {
    %c0_i32 = arith.constant 0 : i32
    %c0_i32_0 = arith.constant 0 : i32
    %c0_i32_1 = arith.constant 0 : i32
    return %arg1, %c0_i32, %c0_i32_0 : i32, i32, i32
  }
  func.func @transform_6(%arg0: i32, %arg1: i32) -> (i32, i32, i32) {
    %c0_i32 = arith.constant 0 : i32
    %c0_i32_0 = arith.constant 0 : i32
    %c0_i32_1 = arith.constant 0 : i32
    return %arg1, %c0_i32, %c0_i32_0 : i32, i32, i32
  }
  func.func @transform_7(%arg0: i32, %arg1: i32) -> (i32, i32, i32) {
    %c0_i32 = arith.constant 0 : i32
    %c0_i32_0 = arith.constant 0 : i32
    %c0_i32_1 = arith.constant 0 : i32
    return %arg1, %c0_i32, %c0_i32_0 : i32, i32, i32
  }
  func.func @transform_8(%arg0: i32, %arg1: i32) -> (i32, i32, i32) {
    %c0_i32 = arith.constant 0 : i32
    %c0_i32_0 = arith.constant 0 : i32
    %c0_i32_1 = arith.constant 0 : i32
    return %arg1, %c0_i32, %c0_i32_0 : i32, i32, i32
  }
  func.func @transform_9(%arg0: i32, %arg1: i32) -> (i32, i32, i32) {
    %c0_i32 = arith.constant 0 : i32
    %c0_i32_0 = arith.constant 0 : i32
    %c0_i32_1 = arith.constant 0 : i32
    return %arg1, %c0_i32, %c0_i32_0 : i32, i32, i32
  }
  func.func @transform_10(%arg0: i32, %arg1: i32) -> (i32, i32, i32) {
    %c0_i32 = arith.constant 0 : i32
    %c0_i32_0 = arith.constant 0 : i32
    %c0_i32_1 = arith.constant 0 : i32
    return %arg1, %c0_i32, %c0_i32_0 : i32, i32, i32
  }
  func.func @transform_11(%arg0: i32, %arg1: i32) -> (i32, i32, i32) {
    %c0_i32 = arith.constant 0 : i32
    %c0_i32_0 = arith.constant 0 : i32
    %c0_i32_1 = arith.constant 0 : i32
    return %arg1, %c0_i32, %c0_i32_0 : i32, i32, i32
  }
  func.func @transform_12(%arg0: i32, %arg1: i32) -> (i32, i32, i32) {
    %c0_i32 = arith.constant 0 : i32
    %c0_i32_0 = arith.constant 0 : i32
    %c0_i32_1 = arith.constant 0 : i32
    return %arg1, %c0_i32, %c0_i32_0 : i32, i32, i32
  }
  func.func @transform_13(%arg0: i32, %arg1: i32) -> (i32, i32, i32) {
    %c0_i32 = arith.constant 0 : i32
    %c0_i32_0 = arith.constant 0 : i32
    %c0_i32_1 = arith.constant 0 : i32
    return %arg1, %c0_i32, %c0_i32_0 : i32, i32, i32
  }
  func.func @transform_14(%arg0: i32, %arg1: i32) -> (i32, i32) {
    %c0_i32 = arith.constant 0 : i32
    %c0_i32_0 = arith.constant 0 : i32
    %c0_i32_1 = arith.constant 0 : i32
    return %c0_i32, %c0_i32_0 : i32, i32
  }
  func.func @transform_15(%arg0: i32, %arg1: i32) -> (i32, i32) {
    %c0_i32 = arith.constant 0 : i32
    %c0_i32_0 = arith.constant 0 : i32
    %c0_i32_1 = arith.constant 0 : i32
    return %c0_i32, %c0_i32_0 : i32, i32
  }
  func.func @transform_16(%arg0: i32, %arg1: i32) -> (i32, i32, i32) {
    %c0_i32 = arith.constant 0 : i32
    %c0_i32_0 = arith.constant 0 : i32
    %c0_i32_1 = arith.constant 0 : i32
    return %arg0, %c0_i32, %c0_i32_0 : i32, i32, i32
  }
}

</mosaic_0001>

<llo_original>
// kernel: adapted_transformer_encoder.1
$region0: #{adapted_transformer_encoder.1}
  #allocation0 [shape = 'u32[]', space=smem, size = 0x4, offset = 0x4, fixed_abs, tag = 'smem constant byte address 0x4 - core index']
  #allocation1 [shape = 'u32[144,128]{1,0:T(1,128)}', space=vmem, size = 0x12000, scoped, tag = 'internal scratch']
  #allocation2 [shape = 'f32[16,128]{1,0:T(8,128)}', space=vmem, size = 0x2000, scoped, tag = 'scratch operand']
  %s0 = inlined_call_operand.hbm [shape: f32[2,16,128], index: 0, kind: input, shape index: {}]
  %s1 = inlined_call_operand.vmem [shape: f32[16,128], index: 1, kind: input, shape index: {}]
  %s2 = inlined_call_operand.hbm [shape: bf16[2,128,384], index: 2, kind: input, shape index: {}]
  %s3 = inlined_call_operand.vmem [shape: f32[2,1,384], index: 3, kind: input, shape index: {}]
  %s4 = inlined_call_operand.hbm [shape: bf16[2,4,32,128], index: 4, kind: input, shape index: {}]
  %s5 = inlined_call_operand.vmem [shape: f32[2,1,128], index: 5, kind: input, shape index: {}]
  %s6 = inlined_call_operand.vmem [shape: f32[2,1,128], index: 6, kind: input, shape index: {}]
  %s7 = inlined_call_operand.hbm [shape: f32[2,1,128], index: 7, kind: input, shape index: {}]
  %s8 = inlined_call_operand.hbm [shape: bf16[2,128,256], index: 8, kind: input, shape index: {}]
  %s9 = inlined_call_operand.hbm [shape: f32[2,1,256], index: 9, kind: input, shape index: {}]
  %s10 = inlined_call_operand.hbm [shape: bf16[2,256,128], index: 10, kind: input, shape index: {}]
  %s11 = inlined_call_operand.hbm [shape: f32[2,1,128], index: 11, kind: input, shape index: {}]
  %s12 = inlined_call_operand.hbm [shape: f32[2,1,128], index: 12, kind: input, shape index: {}]
  %s13 = inlined_call_operand.hbm [shape: f32[2,1,128], index: 13, kind: input, shape index: {}]
  %s14 = inlined_call_operand.vmem [shape: f32[1,128], index: 14, kind: input, shape index: {}]
  %s15 = inlined_call_operand.hbm [shape: f32[1,128], index: 15, kind: input, shape index: {}]
  %s16 = inlined_call_operand.hbm [shape: f32[2,16,128], index: 16, kind: output, shape index: {}]
  %s17 = sld [smem:[#allocation0]]
  $region149: #{adapted_transformer_encoder.1} parent=0
    _
  %s19 = ssub.s32 1, %s17
  %s20 = scalar_select 0, %s19, %s17
  $region1: #{adapted_transformer_encoder.1} parent=0
    #allocation3 [shape = 'u8[16384]{0}', space=vmem, size = 0x4000, scoped, tag = 'input window, operand 0']
    #allocation4 [shape = 's32[2]{0}', space=sflag, size = 0x8, scoped, tag = 'scoped memory for adapted_transformer_encoder.1']
    #allocation5 [shape = 's32[2]{0}', space=sflag, size = 0x8, scoped, tag = 'scoped memory for adapted_transformer_encoder.1']
    #allocation6 [shape = 'u8[196608]{0}', space=vmem, size = 0x30000, scoped, tag = 'input window, operand 2']
    #allocation7 [shape = 's32[2]{0}', space=sflag, size = 0x8, scoped, tag = 'scoped memory for adapted_transformer_encoder.1']
    #allocation8 [shape = 'u8[65536]{0}', space=vmem, size = 0x10000, scoped, tag = 'input window, operand 4']
    #allocation9 [shape = 'u8[1024]{0}', space=vmem, size = 0x400, scoped, tag = 'input window, operand 7']
    #allocation10 [shape = 's32[2]{0}', space=sflag, size = 0x8, scoped, tag = 'scoped memory for adapted_transformer_encoder.1']
    #allocation11 [shape = 'u8[131072]{0}', space=vmem, size = 0x20000, scoped, tag = 'input window, operand 8']
    #allocation12 [shape = 'u8[2048]{0}', space=vmem, size = 0x800, scoped, tag = 'input window, operand 9']
    #allocation13 [shape = 's32[2]{0}', space=sflag, size = 0x8, scoped, tag = 'scoped memory for adapted_transformer_encoder.1']
    #allocation14 [shape = 'u8[131072]{0}', space=vmem, size = 0x20000, scoped, tag = 'input window, operand 10']
    #allocation15 [shape = 'u8[1024]{0}', space=vmem, size = 0x400, scoped, tag = 'input window, operand 11']
    #allocation16 [shape = 's32[2]{0}', space=sflag, size = 0x8, scoped, tag = 'scoped memory for adapted_transformer_encoder.1']
    #allocation17 [shape = 'u8[1024]{0}', space=vmem, size = 0x400, scoped, tag = 'input window, operand 12']
    #allocation18 [shape = 'u8[1024]{0}', space=vmem, size = 0x400, scoped, tag = 'input window, operand 13']
    #allocation19 [shape = 's32[2]{0}', space=sflag, size = 0x8, scoped, tag = 'scoped memory for adapted_transformer_encoder.1']
    #allocation20 [shape = 'u8[512]{0}', space=vmem, size = 0x400, scoped, tag = 'input window, operand 15, single buffered']
    #allocation21 [shape = 'u8[16384]{0}', space=vmem, size = 0x4000, scoped, tag = 'output window, operand 0']
    %21 = vsyncpa [#allocation4], 0
    %s22 = scalar_lea.sflag [#allocation4], 1
    %23 = vsyncpa %s22, 0
    %24 = vsyncpa [#allocation7], 0
    %s25 = scalar_lea.sflag [#allocation7], 1
    %26 = vsyncpa %s25, 0
    %27 = vsyncpa [#allocation10], 0
    %s28 = scalar_lea.sflag [#allocation10], 1
    %29 = vsyncpa %s28, 0
    %30 = vsyncpa [#allocation13], 0
    %s31 = scalar_lea.sflag [#allocation13], 1
    %32 = vsyncpa %s31, 0
    %33 = vsyncpa [#allocation16], 0
    %s34 = scalar_lea.sflag [#allocation16], 1
    %35 = vsyncpa %s34, 0
    %36 = vsyncpa [#allocation19], 0
    %s37 = scalar_lea.sflag [#allocation19], 1
    %38 = vsyncpa %s37, 0
    %39 = vsyncpa [#allocation5], 0
    %s40 = scalar_lea.sflag [#allocation5], 1
    %41 = vsyncpa %s40, 0
    loop: start=0, step=1, limit=6
    $region2: #{adapted_transformer_encoder.1} parent=1 // loop_pre_header
      _
    $region3: #{adapted_transformer_encoder.1} parent=1 // loop_header
      %s43 = sphi 0, %s47
      %p44 = scmp.ge.s32.totalorder %s43, 6
      %s50 = sphi 0, %s62
      %s51 = sphi 0, %s58
      %s52 = sphi 0, %s50
      %s53 = sphi 0, %s51
      %s54 = sphi 0, %s52
      %s55 = sphi 0, %s53
      %s65 = sphi 0, %s67
      %s68 = sphi 0, %s65
      %s69 = sphi 0, %s68
      %s85 = sphi 0, %s69
      %s89 = sphi 0, %s89
      %s91 = sphi 0, %s89
      %s92 = sphi 0, %s91
      %s106 = sphi 0, %s92
      %s112 = sphi 0, %s114
      %s115 = sphi 0, %s112
      %s116 = sphi 0, %s115
      %s132 = sphi 0, %s116
      %s138 = sphi 0, %s140
      %s141 = sphi 0, %s138
      %s142 = sphi 0, %s141
      %s158 = sphi 0, %s142
      %s164 = sphi 0, %s166
      %s167 = sphi 0, %s164
      %s168 = sphi 0, %s167
      %s184 = sphi 0, %s168
      %s190 = sphi 0, %s192
      %s193 = sphi 0, %s190
      %s194 = sphi 0, %s193
      %s210 = sphi 0, %s194
      %s216 = sphi 0, %s218
      %s219 = sphi 0, %s216
      %s220 = sphi 0, %s219
      %s236 = sphi 0, %s220
      %s242 = sphi 0, %s244
      %s245 = sphi 0, %s242
      %s246 = sphi 0, %s245
      %s262 = sphi 0, %s246
      %s268 = sphi 0, %s270
      %s271 = sphi 0, %s268
      %s272 = sphi 0, %s271
      %s288 = sphi 0, %s272
      %s294 = sphi 0, %s296
      %s297 = sphi 0, %s294
      %s298 = sphi 0, %s297
      %s314 = sphi 0, %s298
      %s320 = sphi 0, %s322
      %s323 = sphi 0, %s320
      %s324 = sphi 0, %s323
      %s340 = sphi 0, %s324
      %s346 = sphi 0, %s348
      %s349 = sphi 0, %s346
      %s350 = sphi 0, %s349
      %s366 = sphi 0, %s350
      %s372 = sphi 0, %s374
      %s375 = sphi 0, %s372
      %s376 = sphi 0, %s375
      %s392 = sphi 0, %s376
      %s398 = sphi 0, %s400
      %s401 = sphi 0, %s398
      %s402 = sphi 0, %s401
      %s418 = sphi 0, %s402
      %s422 = sphi 0, %s422
      %s424 = sphi 0, %s422
      %s425 = sphi 0, %s424
      %s439 = sphi 0, %s425
      %s443 = sphi 0, %s443
      %s445 = sphi 0, %s443
      %s446 = sphi 0, %s445
      %s460 = sphi 0, %s446
      %s466 = sphi 0, %s468
      %s469 = sphi 0, %s466
      %s470 = sphi 0, %s469
      %s486 = sphi 0, %s470
    $region4: #{adapted_transformer_encoder.1} parent=1 // loop_header_branch
      %46 = sbr.rel (%p44) target = $region8
    $region5: #{adapted_transformer_encoder.1} parent=1 // loop_body
      %s48 = ssub.s32 %s43, 1
      %s49 = ssub.s32 %s43, 2
      %s56 = sadd.s32 1, %s51
      %p57 = scmp.ge.s32.totalorder %s56, 2
      %s58 = scalar_select %p57, 0, %s56
      %s59 = sadd.s32 1, %s50
      %s60 = scalar_select %p57, %s59, %s50
      %p61 = scmp.ge.s32.totalorder %s60, 2
      %s62 = scalar_select %p61, 0, %s60
      %s63 = ssub.s32 %s50, %s62
      %p64 = scmp.eq.s32.totalorder %s63, 0
      %s66 = sadd.s32 %s65, 1
      %s67 = scalar_select %p64, %s65, %s66
      %p70 = pneg %p64
      %p71 = scmp.eq.s32.totalorder %s43, 3
      %p72 = por %p70, %p71
      %p73 = scmp.ne.s32.totalorder %s65, %s68
      %p74 = scmp.eq.s32.totalorder %s43, 0
      %p75 = por %p73, %p74
      %p76 = scmp.ne.s32.totalorder %s65, %s68
      %p77 = scmp.eq.s32.totalorder %s48, 3
      %p78 = por %p76, %p77
      %p79 = scmp.ne.s32.totalorder %s68, %s69
      %p80 = scmp.eq.s32.totalorder %s48, 0
      %p81 = por %p79, %p80
      %p82 = scmp.ne.s32.totalorder %s68, %s69
      %p83 = scmp.eq.s32.totalorder %s49, 3
      %p84 = por %p82, %p83
      %p86 = scmp.ne.s32.totalorder %s69, %s85
      %p87 = scmp.eq.s32.totalorder %s49, 0
      %p88 = por %p86, %p87
      %s90 = sadd.s32 %s89, 1
      %p93 = scmp.eq.s32.totalorder %s43, 3
      %p94 = scmp.ne.s32.totalorder %s89, %s91
      %p95 = scmp.eq.s32.totalorder %s43, 0
      %p96 = por %p94, %p95
      %p97 = scmp.ne.s32.totalorder %s89, %s91
      %p98 = scmp.eq.s32.totalorder %s48, 3
      %p99 = por %p97, %p98
      %p100 = scmp.ne.s32.totalorder %s91, %s92
      %p101 = scmp.eq.s32.totalorder %s48, 0
      %p102 = por %p100, %p101
      %p103 = scmp.ne.s32.totalorder %s91, %s92
      %p104 = scmp.eq.s32.totalorder %s49, 3
      %p105 = por %p103, %p104
      %p107 = scmp.ne.s32.totalorder %s92, %s106
      %p108 = scmp.eq.s32.totalorder %s49, 0
      %p109 = por %p107, %p108
      %s110 = ssub.s32 %s51, %s58
      %p111 = scmp.eq.s32.totalorder %s110, 0
      %s113 = sadd.s32 %s112, 1
      %s114 = scalar_select %p111, %s112, %s113
      %p117 = pneg %p111
      %p118 = scmp.eq.s32.totalorder %s43, 3
      %p119 = por %p117, %p118
      %p120 = scmp.ne.s32.totalorder %s112, %s115
      %p121 = scmp.eq.s32.totalorder %s43, 0
      %p122 = por %p120, %p121
      %p123 = scmp.ne.s32.totalorder %s112, %s115
      %p124 = scmp.eq.s32.totalorder %s48, 3
      %p125 = por %p123, %p124
      %p126 = scmp.ne.s32.totalorder %s115, %s116
      %p127 = scmp.eq.s32.totalorder %s48, 0
      %p128 = por %p126, %p127
      %p129 = scmp.ne.s32.totalorder %s115, %s116
      %p130 = scmp.eq.s32.totalorder %s49, 3
      %p131 = por %p129, %p130
      %p133 = scmp.ne.s32.totalorder %s116, %s132
      %p134 = scmp.eq.s32.totalorder %s49, 0
      %p135 = por %p133, %p134
      %s136 = ssub.s32 %s51, %s58
      %p137 = scmp.eq.s32.totalorder %s136, 0
      %s139 = sadd.s32 %s138, 1
      %s140 = scalar_select %p137, %s138, %s139
      %p143 = pneg %p137
      %p144 = scmp.eq.s32.totalorder %s43, 3
      %p145 = por %p143, %p144
      %p146 = scmp.ne.s32.totalorder %s138, %s141
      %p147 = scmp.eq.s32.totalorder %s43, 0
      %p148 = por %p146, %p147
      %p149 = scmp.ne.s32.totalorder %s138, %s141
      %p150 = scmp.eq.s32.totalorder %s48, 3
      %p151 = por %p149, %p150
      %p152 = scmp.ne.s32.totalorder %s141, %s142
      %p153 = scmp.eq.s32.totalorder %s48, 0
      %p154 = por %p152, %p153
      %p155 = scmp.ne.s32.totalorder %s141, %s142
      %p156 = scmp.eq.s32.totalorder %s49, 3
      %p157 = por %p155, %p156
      %p159 = scmp.ne.s32.totalorder %s142, %s158
      %p160 = scmp.eq.s32.totalorder %s49, 0
      %p161 = por %p159, %p160
      %s162 = ssub.s32 %s51, %s58
      %p163 = scmp.eq.s32.totalorder %s162, 0
      %s165 = sadd.s32 %s164, 1
      %s166 = scalar_select %p163, %s164, %s165
      %p169 = pneg %p163
      %p170 = scmp.eq.s32.totalorder %s43, 3
      %p171 = por %p169, %p170
      %p172 = scmp.ne.s32.totalorder %s164, %s167
      %p173 = scmp.eq.s32.totalorder %s43, 0
      %p174 = por %p172, %p173
      %p175 = scmp.ne.s32.totalorder %s164, %s167
      %p176 = scmp.eq.s32.totalorder %s48, 3
      %p177 = por %p175, %p176
      %p178 = scmp.ne.s32.totalorder %s167, %s168
      %p179 = scmp.eq.s32.totalorder %s48, 0
      %p180 = por %p178, %p179
      %p181 = scmp.ne.s32.totalorder %s167, %s168
      %p182 = scmp.eq.s32.totalorder %s49, 3
      %p183 = por %p181, %p182
      %p185 = scmp.ne.s32.totalorder %s168, %s184
      %p186 = scmp.eq.s32.totalorder %s49, 0
      %p187 = por %p185, %p186
      %s188 = ssub.s32 %s51, %s58
      %p189 = scmp.eq.s32.totalorder %s188, 0
      %s191 = sadd.s32 %s190, 1
      %s192 = scalar_select %p189, %s190, %s191
      %p195 = pneg %p189
      %p196 = scmp.eq.s32.totalorder %s43, 3
      %p197 = por %p195, %p196
      %p198 = scmp.ne.s32.totalorder %s190, %s193
      %p199 = scmp.eq.s32.totalorder %s43, 0
      %p200 = por %p198, %p199
      %p201 = scmp.ne.s32.totalorder %s190, %s193
      %p202 = scmp.eq.s32.totalorder %s48, 3
      %p203 = por %p201, %p202
      %p204 = scmp.ne.s32.totalorder %s193, %s194
      %p205 = scmp.eq.s32.totalorder %s48, 0
      %p206 = por %p204, %p205
      %p207 = scmp.ne.s32.totalorder %s193, %s194
      %p208 = scmp.eq.s32.totalorder %s49, 3
      %p209 = por %p207, %p208
      %p211 = scmp.ne.s32.totalorder %s194, %s210
      %p212 = scmp.eq.s32.totalorder %s49, 0
      %p213 = por %p211, %p212
      %s214 = ssub.s32 %s51, %s58
      %p215 = scmp.eq.s32.totalorder %s214, 0
      %s217 = sadd.s32 %s216, 1
      %s218 = scalar_select %p215, %s216, %s217
      %p221 = pneg %p215
      %p222 = scmp.eq.s32.totalorder %s43, 3
      %p223 = por %p221, %p222
      %p224 = scmp.ne.s32.totalorder %s216, %s219
      %p225 = scmp.eq.s32.totalorder %s43, 0
      %p226 = por %p224, %p225
      %p227 = scmp.ne.s32.totalorder %s216, %s219
      %p228 = scmp.eq.s32.totalorder %s48, 3
      %p229 = por %p227, %p228
      %p230 = scmp.ne.s32.totalorder %s219, %s220
      %p231 = scmp.eq.s32.totalorder %s48, 0
      %p232 = por %p230, %p231
      %p233 = scmp.ne.s32.totalorder %s219, %s220
      %p234 = scmp.eq.s32.totalorder %s49, 3
      %p235 = por %p233, %p234
      %p237 = scmp.ne.s32.totalorder %s220, %s236
      %p238 = scmp.eq.s32.totalorder %s49, 0
      %p239 = por %p237, %p238
      %s240 = ssub.s32 %s51, %s58
      %p241 = scmp.eq.s32.totalorder %s240, 0
      %s243 = sadd.s32 %s242, 1
      %s244 = scalar_select %p241, %s242, %s243
      %p247 = pneg %p241
      %p248 = scmp.eq.s32.totalorder %s43, 3
      %p249 = por %p247, %p248
      %p250 = scmp.ne.s32.totalorder %s242, %s245
      %p251 = scmp.eq.s32.totalorder %s43, 0
      %p252 = por %p250, %p251
      %p253 = scmp.ne.s32.totalorder %s242, %s245
      %p254 = scmp.eq.s32.totalorder %s48, 3
      %p255 = por %p253, %p254
      %p256 = scmp.ne.s32.totalorder %s245, %s246
      %p257 = scmp.eq.s32.totalorder %s48, 0
      %p258 = por %p256, %p257
      %p259 = scmp.ne.s32.totalorder %s245, %s246
      %p260 = scmp.eq.s32.totalorder %s49, 3
      %p261 = por %p259, %p260
      %p263 = scmp.ne.s32.totalorder %s246, %s262
      %p264 = scmp.eq.s32.totalorder %s49, 0
      %p265 = por %p263, %p264
      %s266 = ssub.s32 %s51, %s58
      %p267 = scmp.eq.s32.totalorder %s266, 0
      %s269 = sadd.s32 %s268, 1
      %s270 = scalar_select %p267, %s268, %s269
      %p273 = pneg %p267
      %p274 = scmp.eq.s32.totalorder %s43, 3
      %p275 = por %p273, %p274
      %p276 = scmp.ne.s32.totalorder %s268, %s271
      %p277 = scmp.eq.s32.totalorder %s43, 0
      %p278 = por %p276, %p277
      %p279 = scmp.ne.s32.totalorder %s268, %s271
      %p280 = scmp.eq.s32.totalorder %s48, 3
      %p281 = por %p279, %p280
      %p282 = scmp.ne.s32.totalorder %s271, %s272
      %p283 = scmp.eq.s32.totalorder %s48, 0
      %p284 = por %p282, %p283
      %p285 = scmp.ne.s32.totalorder %s271, %s272
      %p286 = scmp.eq.s32.totalorder %s49, 3
      %p287 = por %p285, %p286
      %p289 = scmp.ne.s32.totalorder %s272, %s288
      %p290 = scmp.eq.s32.totalorder %s49, 0
      %p291 = por %p289, %p290
      %s292 = ssub.s32 %s51, %s58
      %p293 = scmp.eq.s32.totalorder %s292, 0
      %s295 = sadd.s32 %s294, 1
      %s296 = scalar_select %p293, %s294, %s295
      %p299 = pneg %p293
      %p300 = scmp.eq.s32.totalorder %s43, 3
      %p301 = por %p299, %p300
      %p302 = scmp.ne.s32.totalorder %s294, %s297
      %p303 = scmp.eq.s32.totalorder %s43, 0
      %p304 = por %p302, %p303
      %p305 = scmp.ne.s32.totalorder %s294, %s297
      %p306 = scmp.eq.s32.totalorder %s48, 3
      %p307 = por %p305, %p306
      %p308 = scmp.ne.s32.totalorder %s297, %s298
      %p309 = scmp.eq.s32.totalorder %s48, 0
      %p310 = por %p308, %p309
      %p311 = scmp.ne.s32.totalorder %s297, %s298
      %p312 = scmp.eq.s32.totalorder %s49, 3
      %p313 = por %p311, %p312
      %p315 = scmp.ne.s32.totalorder %s298, %s314
      %p316 = scmp.eq.s32.totalorder %s49, 0
      %p317 = por %p315, %p316
      %s318 = ssub.s32 %s51, %s58
      %p319 = scmp.eq.s32.totalorder %s318, 0
      %s321 = sadd.s32 %s320, 1
      %s322 = scalar_select %p319, %s320, %s321
      %p325 = pneg %p319
      %p326 = scmp.eq.s32.totalorder %s43, 3
      %p327 = por %p325, %p326
      %p328 = scmp.ne.s32.totalorder %s320, %s323
      %p329 = scmp.eq.s32.totalorder %s43, 0
      %p330 = por %p328, %p329
      %p331 = scmp.ne.s32.totalorder %s320, %s323
      %p332 = scmp.eq.s32.totalorder %s48, 3
      %p333 = por %p331, %p332
      %p334 = scmp.ne.s32.totalorder %s323, %s324
      %p335 = scmp.eq.s32.totalorder %s48, 0
      %p336 = por %p334, %p335
      %p337 = scmp.ne.s32.totalorder %s323, %s324
      %p338 = scmp.eq.s32.totalorder %s49, 3
      %p339 = por %p337, %p338
      %p341 = scmp.ne.s32.totalorder %s324, %s340
      %p342 = scmp.eq.s32.totalorder %s49, 0
      %p343 = por %p341, %p342
      %s344 = ssub.s32 %s51, %s58
      %p345 = scmp.eq.s32.totalorder %s344, 0
      %s347 = sadd.s32 %s346, 1
      %s348 = scalar_select %p345, %s346, %s347
      %p351 = pneg %p345
      %p352 = scmp.eq.s32.totalorder %s43, 3
      %p353 = por %p351, %p352
      %p354 = scmp.ne.s32.totalorder %s346, %s349
      %p355 = scmp.eq.s32.totalorder %s43, 0
      %p356 = por %p354, %p355
      %p357 = scmp.ne.s32.totalorder %s346, %s349
      %p358 = scmp.eq.s32.totalorder %s48, 3
      %p359 = por %p357, %p358
      %p360 = scmp.ne.s32.totalorder %s349, %s350
      %p361 = scmp.eq.s32.totalorder %s48, 0
      %p362 = por %p360, %p361
      %p363 = scmp.ne.s32.totalorder %s349, %s350
      %p364 = scmp.eq.s32.totalorder %s49, 3
      %p365 = por %p363, %p364
      %p367 = scmp.ne.s32.totalorder %s350, %s366
      %p368 = scmp.eq.s32.totalorder %s49, 0
      %p369 = por %p367, %p368
      %s370 = ssub.s32 %s51, %s58
      %p371 = scmp.eq.s32.totalorder %s370, 0
      %s373 = sadd.s32 %s372, 1
      %s374 = scalar_select %p371, %s372, %s373
      %p377 = pneg %p371
      %p378 = scmp.eq.s32.totalorder %s43, 3
      %p379 = por %p377, %p378
      %p380 = scmp.ne.s32.totalorder %s372, %s375
      %p381 = scmp.eq.s32.totalorder %s43, 0
      %p382 = por %p380, %p381
      %p383 = scmp.ne.s32.totalorder %s372, %s375
      %p384 = scmp.eq.s32.totalorder %s48, 3
      %p385 = por %p383, %p384
      %p386 = scmp.ne.s32.totalorder %s375, %s376
      %p387 = scmp.eq.s32.totalorder %s48, 0
      %p388 = por %p386, %p387
      %p389 = scmp.ne.s32.totalorder %s375, %s376
      %p390 = scmp.eq.s32.totalorder %s49, 3
      %p391 = por %p389, %p390
      %p393 = scmp.ne.s32.totalorder %s376, %s392
      %p394 = scmp.eq.s32.totalorder %s49, 0
      %p395 = por %p393, %p394
      %s396 = ssub.s32 %s51, %s58
      %p397 = scmp.eq.s32.totalorder %s396, 0
      %s399 = sadd.s32 %s398, 1
      %s400 = scalar_select %p397, %s398, %s399
      %p403 = pneg %p397
      %p404 = scmp.eq.s32.totalorder %s43, 3
      %p405 = por %p403, %p404
      %p406 = scmp.ne.s32.totalorder %s398, %s401
      %p407 = scmp.eq.s32.totalorder %s43, 0
      %p408 = por %p406, %p407
      %p409 = scmp.ne.s32.totalorder %s398, %s401
      %p410 = scmp.eq.s32.totalorder %s48, 3
      %p411 = por %p409, %p410
      %p412 = scmp.ne.s32.totalorder %s401, %s402
      %p413 = scmp.eq.s32.totalorder %s48, 0
      %p414 = por %p412, %p413
      %p415 = scmp.ne.s32.totalorder %s401, %s402
      %p416 = scmp.eq.s32.totalorder %s49, 3
      %p417 = por %p415, %p416
      %p419 = scmp.ne.s32.totalorder %s402, %s418
      %p420 = scmp.eq.s32.totalorder %s49, 0
      %p421 = por %p419, %p420
      %s423 = sadd.s32 %s422, 1
      %p426 = scmp.eq.s32.totalorder %s43, 3
      %p427 = scmp.ne.s32.totalorder %s422, %s424
      %p428 = scmp.eq.s32.totalorder %s43, 0
      %p429 = por %p427, %p428
      %p430 = scmp.ne.s32.totalorder %s422, %s424
      %p431 = scmp.eq.s32.totalorder %s48, 3
      %p432 = por %p430, %p431
      %p433 = scmp.ne.s32.totalorder %s424, %s425
      %p434 = scmp.eq.s32.totalorder %s48, 0
      %p435 = por %p433, %p434
      %p436 = scmp.ne.s32.totalorder %s424, %s425
      %p437 = scmp.eq.s32.totalorder %s49, 3
      %p438 = por %p436, %p437
      %p440 = scmp.ne.s32.totalorder %s425, %s439
      %p441 = scmp.eq.s32.totalorder %s49, 0
      %p442 = por %p440, %p441
      %s444 = sadd.s32 %s443, 1
      %p447 = scmp.eq.s32.totalorder %s43, 3
      %p448 = scmp.ne.s32.totalorder %s443, %s445
      %p449 = scmp.eq.s32.totalorder %s43, 0
      %p450 = por %p448, %p449
      %p451 = scmp.ne.s32.totalorder %s443, %s445
      %p452 = scmp.eq.s32.totalorder %s48, 3
      %p453 = por %p451, %p452
      %p454 = scmp.ne.s32.totalorder %s445, %s446
      %p455 = scmp.eq.s32.totalorder %s48, 0
      %p456 = por %p454, %p455
      %p457 = scmp.ne.s32.totalorder %s445, %s446
      %p458 = scmp.eq.s32.totalorder %s49, 3
      %p459 = por %p457, %p458
      %p461 = scmp.ne.s32.totalorder %s446, %s460
      %p462 = scmp.eq.s32.totalorder %s49, 0
      %p463 = por %p461, %p462
      %s464 = ssub.s32 %s50, %s62
      %p465 = scmp.eq.s32.totalorder %s464, 0
      %s467 = sadd.s32 %s466, 1
      %s468 = scalar_select %p465, %s466, %s467
      %p471 = pneg %p465
      %p472 = scmp.eq.s32.totalorder %s43, 3
      %p473 = por %p471, %p472
      %p474 = scmp.ne.s32.totalorder %s466, %s469
      %p475 = scmp.eq.s32.totalorder %s43, 0
      %p476 = por %p474, %p475
      %p477 = scmp.ne.s32.totalorder %s466, %s469
      %p478 = scmp.eq.s32.totalorder %s48, 3
      %p479 = por %p477, %p478
      %p480 = scmp.ne.s32.totalorder %s469, %s470
      %p481 = scmp.eq.s32.totalorder %s48, 0
      %p482 = por %p480, %p481
      %p483 = scmp.ne.s32.totalorder %s469, %s470
      %p484 = scmp.eq.s32.totalorder %s49, 3
      %p485 = por %p483, %p484
      %p487 = scmp.ne.s32.totalorder %s470, %s486
      %p488 = scmp.eq.s32.totalorder %s49, 0
      %p489 = por %p487, %p488
      %p490 = scmp.le.s32.totalorder 1, %s43
      %p491 = scmp.lt.s32.totalorder %s43, 5
      %p492 = pnand %p490, %p491
      %p493 = pneg %p492
      // Predicated region
      $region9: #{adapted_transformer_encoder.1} parent=5 // pred_check
        _
      $region10: #{adapted_transformer_encoder.1} parent=5 // pred_check_branch
        %495 = sbr.rel (%p492) target = $region12
      $region11: #{adapted_transformer_encoder.1} parent=5 // pred_region
        %s496 = ssub.s32 %s43, 1
        // Predicated region
        $region13: #{adapted_transformer_encoder.1} parent=11 // pred_check
          %p497 = pneg %p102
        $region14: #{adapted_transformer_encoder.1} parent=11 // pred_check_branch
          %499 = sbr.rel (%p497) target = $region16
        $region15: #{adapted_transformer_encoder.1} parent=11 // pred_region
          _
        $region16: #{adapted_transformer_encoder.1} parent=11 // pred_fallthru
          _
        // Predicated region
        $region17: #{adapted_transformer_encoder.1} parent=11 // pred_check
          %p500 = pneg %p435
        $region18: #{adapted_transformer_encoder.1} parent=11 // pred_check_branch
          %502 = sbr.rel (%p500) target = $region20
        $region19: #{adapted_transformer_encoder.1} parent=11 // pred_region
          _
        $region20: #{adapted_transformer_encoder.1} parent=11 // pred_fallthru
          _
        // Predicated region
        $region21: #{adapted_transformer_encoder.1} parent=11 // pred_check
          %p503 = pneg %p456
        $region22: #{adapted_transformer_encoder.1} parent=11 // pred_check_branch
          %505 = sbr.rel (%p503) target = $region24
        $region23: #{adapted_transformer_encoder.1} parent=11 // pred_region
          %s507 = ssub.s32 16, 16
          %508 = vsyncadd [#allocation19], %s507
          %s510 = sshll.u32 [#allocation20], 4
          %s511 = int_to_ptr.vmem [resolvable:$true] %s510
          %513 = dma.hbm_to_vmem [thread:$0]  %s15, 16, %s511, [#allocation19]
        $region24: #{adapted_transformer_encoder.1} parent=11 // pred_fallthru
          _
      $region12: #{adapted_transformer_encoder.1} parent=5 // pred_fallthru
        _
      %p514 = scmp.lt.s32.totalorder %s43, 4
      // Predicated region
      $region25: #{adapted_transformer_encoder.1} parent=5 // pred_check
        %p515 = pneg %p514
      $region26: #{adapted_transformer_encoder.1} parent=5 // pred_check_branch
        %517 = sbr.rel (%p515) target = $region28
      $region27: #{adapted_transformer_encoder.1} parent=5 // pred_region
        // Predicated region
        $region29: #{adapted_transformer_encoder.1} parent=27 // pred_check
          %p518 = pneg %p75
        $region30: #{adapted_transformer_encoder.1} parent=27 // pred_check_branch
          %520 = sbr.rel (%p518) target = $region32
        $region31: #{adapted_transformer_encoder.1} parent=27 // pred_region
          %s521 = sand.u32 %s65, 1
          %s522 = scalar_lea.sflag [#allocation4], %s521
          %s523 = sand.u32 %s65, 1
          %s524 = smul.addr %s523, 16
          %s525 = scalar_lea.vmem [#allocation3], %s524
          %s527 = ssub.s32 256, 256
          %528 = vsyncadd %s522, %s527
          %s529 = smul.addr %s50, 2
          %s530 = smul.addr %s529, 128
          %s531 = scalar_lea.hbm %s0, %s530
          %s532 = sshll.u32 %s525, 4
          %s533 = int_to_ptr.vmem [resolvable:$true] %s532
          %538 = dma.hbm_to_vmem [thread:$0]  %s531, 256, %s533, %s522, 128, 128, 8
        $region32: #{adapted_transformer_encoder.1} parent=27 // pred_fallthru
          _
        // Predicated region
        $region33: #{adapted_transformer_encoder.1} parent=27 // pred_check
          %p539 = pneg %p122
        $region34: #{adapted_transformer_encoder.1} parent=27 // pred_check_branch
          %541 = sbr.rel (%p539) target = $region36
        $region35: #{adapted_transformer_encoder.1} parent=27 // pred_region
          %s542 = sand.u32 %s43, 1
          %s543 = scalar_lea.sflag [#allocation7], %s542
          %s544 = sand.u32 %s112, 1
          %s545 = smul.addr %s544, 192
          %s546 = scalar_lea.vmem [#allocation6], %s545
          %s548 = ssub.s32 3072, 3072
          %549 = vsyncadd %s543, %s548
          %s550 = smul.addr %s51, 48
          %s551 = smul.addr %s550, 64
          %s552 = scalar_lea.hbm %s2, %s551
          %s553 = sshll.u32 %s546, 4
          %s554 = int_to_ptr.vmem [resolvable:$true] %s553
          %559 = dma.hbm_to_vmem [thread:$0]  %s552, 3072, %s554, %s543, 192, 192, 12
        $region36: #{adapted_transformer_encoder.1} parent=27 // pred_fallthru
          _
        // Predicated region
        $region37: #{adapted_transformer_encoder.1} parent=27 // pred_check
          %p560 = pneg %p148
        $region38: #{adapted_transformer_encoder.1} parent=27 // pred_check_branch
          %562 = sbr.rel (%p560) target = $region40
        $region39: #{adapted_transformer_encoder.1} parent=27 // pred_region
          %p563 = scmp.lt.s32.totalorder %s51, 1
          %s564 = scalar_select %p563, %s51, 1
          %s565 = smul.addr %s564, 3
          %s566 = scalar_lea.vmem %s3, %s565
        $region40: #{adapted_transformer_encoder.1} parent=27 // pred_fallthru
          _
        // Predicated region
        $region41: #{adapted_transformer_encoder.1} parent=27 // pred_check
          %p567 = pneg %p174
        $region42: #{adapted_transformer_encoder.1} parent=27 // pred_check_branch
          %569 = sbr.rel (%p567) target = $region44
        $region43: #{adapted_transformer_encoder.1} parent=27 // pred_region
          %s570 = sand.u32 %s43, 1
          %s571 = scalar_lea.sflag [#allocation7], %s570
          %s572 = sand.u32 %s164, 1
          %s573 = smul.addr %s572, 64
          %s574 = scalar_lea.vmem [#allocation8], %s573
          %s576 = ssub.s32 1024, 1024
          %577 = vsyncadd %s571, %s576
          %s578 = smul.addr %s51, 16
          %s579 = smul.addr %s578, 64
          %s580 = scalar_lea.hbm %s4, %s579
          %s581 = sshll.u32 %s574, 4
          %s582 = int_to_ptr.vmem [resolvable:$true] %s581
          %587 = dma.hbm_to_vmem [thread:$0]  %s580, 1024, %s582, %s571, 64, 64, 4
        $region44: #{adapted_transformer_encoder.1} parent=27 // pred_fallthru
          _
        // Predicated region
        $region45: #{adapted_transformer_encoder.1} parent=27 // pred_check
          %p588 = pneg %p200
        $region46: #{adapted_transformer_encoder.1} parent=27 // pred_check_branch
          %590 = sbr.rel (%p588) target = $region48
        $region47: #{adapted_transformer_encoder.1} parent=27 // pred_region
          %p591 = scmp.lt.s32.totalorder %s51, 1
          %s592 = scalar_select %p591, %s51, 1
          %s593 = scalar_lea.vmem %s5, %s592
        $region48: #{adapted_transformer_encoder.1} parent=27 // pred_fallthru
          _
        // Predicated region
        $region49: #{adapted_transformer_encoder.1} parent=27 // pred_check
          %p594 = pneg %p226
        $region50: #{adapted_transformer_encoder.1} parent=27 // pred_check_branch
          %596 = sbr.rel (%p594) target = $region52
        $region51: #{adapted_transformer_encoder.1} parent=27 // pred_region
          %p597 = scmp.lt.s32.totalorder %s51, 1
          %s598 = scalar_select %p597, %s51, 1
          %s599 = scalar_lea.vmem %s6, %s598
        $region52: #{adapted_transformer_encoder.1} parent=27 // pred_fallthru
          _
        // Predicated region
        $region53: #{adapted_transformer_encoder.1} parent=27 // pred_check
          %p600 = pneg %p252
        $region54: #{adapted_transformer_encoder.1} parent=27 // pred_check_branch
          %602 = sbr.rel (%p600) target = $region56
        $region55: #{adapted_transformer_encoder.1} parent=27 // pred_region
          %s603 = sand.u32 %s43, 1
          %s604 = scalar_lea.sflag [#allocation10], %s603
          %s605 = sand.u32 %s242, 1
          %s606 = scalar_lea.vmem [#allocation9], %s605
          %s608 = ssub.s32 16, 16
          %609 = vsyncadd %s604, %s608
          %s610 = smul.addr %s51, 16
          %s611 = scalar_lea.hbm %s7, %s610
          %s613 = sshll.u32 %s606, 4
          %s614 = int_to_ptr.vmem [resolvable:$true] %s613
          %616 = dma.hbm_to_vmem [thread:$0]  %s611, 16, %s614, %s604
        $region56: #{adapted_transformer_encoder.1} parent=27 // pred_fallthru
          _
        // Predicated region
        $region57: #{adapted_transformer_encoder.1} parent=27 // pred_check
          %p617 = pneg %p278
        $region58: #{adapted_transformer_encoder.1} parent=27 // pred_check_branch
          %619 = sbr.rel (%p617) target = $region60
        $region59: #{adapted_transformer_encoder.1} parent=27 // pred_region
          %s620 = sand.u32 %s43, 1
          %s621 = scalar_lea.sflag [#allocation10], %s620
          %s622 = sand.u32 %s268, 1
          %s623 = smul.addr %s622, 128
          %s624 = scalar_lea.vmem [#allocation11], %s623
          %s626 = ssub.s32 2048, 2048
          %627 = vsyncadd %s621, %s626
          %s628 = smul.addr %s51, 32
          %s629 = smul.addr %s628, 64
          %s630 = scalar_lea.hbm %s8, %s629
          %s631 = sshll.u32 %s624, 4
          %s632 = int_to_ptr.vmem [resolvable:$true] %s631
          %637 = dma.hbm_to_vmem [thread:$0]  %s630, 2048, %s632, %s621, 128, 128, 8
        $region60: #{adapted_transformer_encoder.1} parent=27 // pred_fallthru
          _
        // Predicated region
        $region61: #{adapted_transformer_encoder.1} parent=27 // pred_check
          %p638 = pneg %p304
        $region62: #{adapted_transformer_encoder.1} parent=27 // pred_check_branch
          %640 = sbr.rel (%p638) target = $region64
        $region63: #{adapted_transformer_encoder.1} parent=27 // pred_region
          %s641 = sand.u32 %s43, 1
          %s642 = scalar_lea.sflag [#allocation13], %s641
          %s643 = sand.u32 %s294, 1
          %s644 = smul.addr %s643, 2
          %s645 = scalar_lea.vmem [#allocation12], %s644
          %s647 = ssub.s32 32, 32
          %648 = vsyncadd %s642, %s647
          %s649 = smul.addr %s51, 2
          %s650 = smul.addr %s649, 16
          %s651 = scalar_lea.hbm %s9, %s650
          %s653 = sshll.u32 %s645, 4
          %s654 = int_to_ptr.vmem [resolvable:$true] %s653
          %656 = dma.hbm_to_vmem [thread:$0]  %s651, 32, %s654, %s642
        $region64: #{adapted_transformer_encoder.1} parent=27 // pred_fallthru
          _
        // Predicated region
        $region65: #{adapted_transformer_encoder.1} parent=27 // pred_check
          %p657 = pneg %p330
        $region66: #{adapted_transformer_encoder.1} parent=27 // pred_check_branch
          %659 = sbr.rel (%p657) target = $region68
        $region67: #{adapted_transformer_encoder.1} parent=27 // pred_region
          %s660 = sand.u32 %s43, 1
          %s661 = scalar_lea.sflag [#allocation13], %s660
          %s662 = sand.u32 %s320, 1
          %s663 = smul.addr %s662, 128
          %s664 = scalar_lea.vmem [#allocation14], %s663
          %s666 = ssub.s32 2048, 2048
          %667 = vsyncadd %s661, %s666
          %s668 = smul.addr %s51, 32
          %s669 = smul.addr %s668, 64
          %s670 = scalar_lea.hbm %s10, %s669
          %s671 = sshll.u32 %s664, 4
          %s672 = int_to_ptr.vmem [resolvable:$true] %s671
          %677 = dma.hbm_to_vmem [thread:$0]  %s670, 2048, %s672, %s661, 64, 64, 4
        $region68: #{adapted_transformer_encoder.1} parent=27 // pred_fallthru
          _
        // Predicated region
        $region69: #{adapted_transformer_encoder.1} parent=27 // pred_check
          %p678 = pneg %p356
        $region70: #{adapted_transformer_encoder.1} parent=27 // pred_check_branch
          %680 = sbr.rel (%p678) target = $region72
        $region71: #{adapted_transformer_encoder.1} parent=27 // pred_region
          %s681 = sand.u32 %s43, 1
          %s682 = scalar_lea.sflag [#allocation16], %s681
          %s683 = sand.u32 %s346, 1
          %s684 = scalar_lea.vmem [#allocation15], %s683
          %s686 = ssub.s32 16, 16
          %687 = vsyncadd %s682, %s686
          %s688 = smul.addr %s51, 16
          %s689 = scalar_lea.hbm %s11, %s688
          %s691 = sshll.u32 %s684, 4
          %s692 = int_to_ptr.vmem [resolvable:$true] %s691
          %694 = dma.hbm_to_vmem [thread:$0]  %s689, 16, %s692, %s682
        $region72: #{adapted_transformer_encoder.1} parent=27 // pred_fallthru
          _
        // Predicated region
        $region73: #{adapted_transformer_encoder.1} parent=27 // pred_check
          %p695 = pneg %p382
        $region74: #{adapted_transformer_encoder.1} parent=27 // pred_check_branch
          %697 = sbr.rel (%p695) target = $region76
        $region75: #{adapted_transformer_encoder.1} parent=27 // pred_region
          %s698 = sand.u32 %s43, 1
          %s699 = scalar_lea.sflag [#allocation16], %s698
          %s700 = sand.u32 %s372, 1
          %s701 = scalar_lea.vmem [#allocation17], %s700
          %s703 = ssub.s32 16, 16
          %704 = vsyncadd %s699, %s703
          %s705 = smul.addr %s51, 16
          %s706 = scalar_lea.hbm %s12, %s705
          %s708 = sshll.u32 %s701, 4
          %s709 = int_to_ptr.vmem [resolvable:$true] %s708
          %711 = dma.hbm_to_vmem [thread:$0]  %s706, 16, %s709, %s699
        $region76: #{adapted_transformer_encoder.1} parent=27 // pred_fallthru
          _
        // Predicated region
        $region77: #{adapted_transformer_encoder.1} parent=27 // pred_check
          %p712 = pneg %p408
        $region78: #{adapted_transformer_encoder.1} parent=27 // pred_check_branch
          %714 = sbr.rel (%p712) target = $region80
        $region79: #{adapted_transformer_encoder.1} parent=27 // pred_region
          %s715 = sand.u32 %s43, 1
          %s716 = scalar_lea.sflag [#allocation19], %s715
          %s717 = sand.u32 %s398, 1
          %s718 = scalar_lea.vmem [#allocation18], %s717
          %s720 = ssub.s32 16, 16
          %721 = vsyncadd %s716, %s720
          %s722 = smul.addr %s51, 16
          %s723 = scalar_lea.hbm %s13, %s722
          %s725 = sshll.u32 %s718, 4
          %s726 = int_to_ptr.vmem [resolvable:$true] %s725
          %728 = dma.hbm_to_vmem [thread:$0]  %s723, 16, %s726, %s716
        $region80: #{adapted_transformer_encoder.1} parent=27 // pred_fallthru
          _
      $region28: #{adapted_transformer_encoder.1} parent=5 // pred_fallthru
        _
      %p729 = scmp.le.s32.totalorder 1, %s43
      %p730 = scmp.lt.s32.totalorder %s43, 5
      %p731 = pnand %p729, %p730
      %p732 = pneg %p731
      // Predicated region
      $region81: #{adapted_transformer_encoder.1} parent=5 // pred_check
        _
      $region82: #{adapted_transformer_encoder.1} parent=5 // pred_check_branch
        %734 = sbr.rel (%p731) target = $region84
      $region83: #{adapted_transformer_encoder.1} parent=5 // pred_region
        %s735 = ssub.s32 %s43, 1
        %s736 = sand.u32 %s68, 1
        %s737 = scalar_lea.sflag [#allocation4], %s736
        %s738 = sand.u32 %s68, 1
        %s739 = smul.addr %s738, 16
        %s740 = scalar_lea.vmem [#allocation3], %s739
        // Predicated region
        $region85: #{adapted_transformer_encoder.1} parent=83 // pred_check
          %p741 = pneg %p81
        $region86: #{adapted_transformer_encoder.1} parent=83 // pred_check_branch
          %743 = sbr.rel (%p741) target = $region88
        $region87: #{adapted_transformer_encoder.1} parent=83 // pred_region
          %744 = dma.done %s737, 256
        $region88: #{adapted_transformer_encoder.1} parent=83 // pred_fallthru
          _
        %s745 = sand.u32 %s48, 1
        %s746 = scalar_lea.sflag [#allocation7], %s745
        %s747 = sand.u32 %s115, 1
        %s748 = smul.addr %s747, 192
        %s749 = scalar_lea.vmem [#allocation6], %s748
        // Predicated region
        $region89: #{adapted_transformer_encoder.1} parent=83 // pred_check
          %p750 = pneg %p128
        $region90: #{adapted_transformer_encoder.1} parent=83 // pred_check_branch
          %752 = sbr.rel (%p750) target = $region92
        $region91: #{adapted_transformer_encoder.1} parent=83 // pred_region
          %753 = dma.done %s746, 3072
        $region92: #{adapted_transformer_encoder.1} parent=83 // pred_fallthru
          _
        %s754 = sand.u32 %s48, 1
        %s755 = scalar_lea.sflag [#allocation7], %s754
        %s756 = sand.u32 %s167, 1
        %s757 = smul.addr %s756, 64
        %s758 = scalar_lea.vmem [#allocation8], %s757
        // Predicated region
        $region93: #{adapted_transformer_encoder.1} parent=83 // pred_check
          %p759 = pneg %p180
        $region94: #{adapted_transformer_encoder.1} parent=83 // pred_check_branch
          %761 = sbr.rel (%p759) target = $region96
        $region95: #{adapted_transformer_encoder.1} parent=83 // pred_region
          %762 = dma.done %s755, 1024
        $region96: #{adapted_transformer_encoder.1} parent=83 // pred_fallthru
          _
        %s763 = sand.u32 %s48, 1
        %s764 = scalar_lea.sflag [#allocation10], %s763
        %s765 = sand.u32 %s245, 1
        %s766 = scalar_lea.vmem [#allocation9], %s765
        // Predicated region
        $region97: #{adapted_transformer_encoder.1} parent=83 // pred_check
          %p767 = pneg %p258
        $region98: #{adapted_transformer_encoder.1} parent=83 // pred_check_branch
          %769 = sbr.rel (%p767) target = $region100
        $region99: #{adapted_transformer_encoder.1} parent=83 // pred_region
          %770 = dma.done %s764, 16
        $region100: #{adapted_transformer_encoder.1} parent=83 // pred_fallthru
          _
        %s771 = sand.u32 %s48, 1
        %s772 = scalar_lea.sflag [#allocation10], %s771
        %s773 = sand.u32 %s271, 1
        %s774 = smul.addr %s773, 128
        %s775 = scalar_lea.vmem [#allocation11], %s774
        // Predicated region
        $region101: #{adapted_transformer_encoder.1} parent=83 // pred_check
          %p776 = pneg %p284
        $region102: #{adapted_transformer_encoder.1} parent=83 // pred_check_branch
          %778 = sbr.rel (%p776) target = $region104
        $region103: #{adapted_transformer_encoder.1} parent=83 // pred_region
          %779 = dma.done %s772, 2048
        $region104: #{adapted_transformer_encoder.1} parent=83 // pred_fallthru
          _
        %s780 = sand.u32 %s48, 1
        %s781 = scalar_lea.sflag [#allocation13], %s780
        %s782 = sand.u32 %s297, 1
        %s783 = smul.addr %s782, 2
        %s784 = scalar_lea.vmem [#allocation12], %s783
        // Predicated region
        $region105: #{adapted_transformer_encoder.1} parent=83 // pred_check
          %p785 = pneg %p310
        $region106: #{adapted_transformer_encoder.1} parent=83 // pred_check_branch
          %787 = sbr.rel (%p785) target = $region108
        $region107: #{adapted_transformer_encoder.1} parent=83 // pred_region
          %788 = dma.done %s781, 32
        $region108: #{adapted_transformer_encoder.1} parent=83 // pred_fallthru
          _
        %s789 = sand.u32 %s48, 1
        %s790 = scalar_lea.sflag [#allocation13], %s789
        %s791 = sand.u32 %s323, 1
        %s792 = smul.addr %s791, 128
        %s793 = scalar_lea.vmem [#allocation14], %s792
        // Predicated region
        $region109: #{adapted_transformer_encoder.1} parent=83 // pred_check
          %p794 = pneg %p336
        $region110: #{adapted_transformer_encoder.1} parent=83 // pred_check_branch
          %796 = sbr.rel (%p794) target = $region112
        $region111: #{adapted_transformer_encoder.1} parent=83 // pred_region
          %797 = dma.done %s790, 2048
        $region112: #{adapted_transformer_encoder.1} parent=83 // pred_fallthru
          _
        %s798 = sand.u32 %s48, 1
        %s799 = scalar_lea.sflag [#allocation16], %s798
        %s800 = sand.u32 %s349, 1
        %s801 = scalar_lea.vmem [#allocation15], %s800
        // Predicated region
        $region113: #{adapted_transformer_encoder.1} parent=83 // pred_check
          %p802 = pneg %p362
        $region114: #{adapted_transformer_encoder.1} parent=83 // pred_check_branch
          %804 = sbr.rel (%p802) target = $region116
        $region115: #{adapted_transformer_encoder.1} parent=83 // pred_region
          %805 = dma.done %s799, 16
        $region116: #{adapted_transformer_encoder.1} parent=83 // pred_fallthru
          _
        %s806 = sand.u32 %s48, 1
        %s807 = scalar_lea.sflag [#allocation16], %s806
        %s808 = sand.u32 %s375, 1
        %s809 = scalar_lea.vmem [#allocation17], %s808
        // Predicated region
        $region117: #{adapted_transformer_encoder.1} parent=83 // pred_check
          %p810 = pneg %p388
        $region118: #{adapted_transformer_encoder.1} parent=83 // pred_check_branch
          %812 = sbr.rel (%p810) target = $region120
        $region119: #{adapted_transformer_encoder.1} parent=83 // pred_region
          %813 = dma.done %s807, 16
        $region120: #{adapted_transformer_encoder.1} parent=83 // pred_fallthru
          _
        %s814 = sand.u32 %s48, 1
        %s815 = scalar_lea.sflag [#allocation19], %s814
        %s816 = sand.u32 %s401, 1
        %s817 = scalar_lea.vmem [#allocation18], %s816
        // Predicated region
        $region121: #{adapted_transformer_encoder.1} parent=83 // pred_check
          %p818 = pneg %p414
        $region122: #{adapted_transformer_encoder.1} parent=83 // pred_check_branch
          %820 = sbr.rel (%p818) target = $region124
        $region123: #{adapted_transformer_encoder.1} parent=83 // pred_region
          %821 = dma.done %s815, 16
        $region124: #{adapted_transformer_encoder.1} parent=83 // pred_fallthru
          _
        // Predicated region
        $region125: #{adapted_transformer_encoder.1} parent=83 // pred_check
          %p822 = pneg %p456
        $region126: #{adapted_transformer_encoder.1} parent=83 // pred_check_branch
          %824 = sbr.rel (%p822) target = $region128
        $region127: #{adapted_transformer_encoder.1} parent=83 // pred_region
          %825 = dma.done [#allocation19], 16
        $region128: #{adapted_transformer_encoder.1} parent=83 // pred_fallthru
          _
        %s826 = sand.u32 %s68, 1
        %s827 = scalar_lea.sflag [#allocation4], %s826
        %s828 = sand.u32 %s68, 1
        %s829 = smul.addr %s828, 16
        %s830 = scalar_lea.vmem [#allocation3], %s829
        %p831 = pneg %p81
        %p832 = pneg %p78
        %p833 = pneg %p102
        %p834 = pneg %p99
        %s835 = sand.u32 %s48, 1
        %s836 = scalar_lea.sflag [#allocation7], %s835
        %s837 = sand.u32 %s115, 1
        %s838 = smul.addr %s837, 192
        %s839 = scalar_lea.vmem [#allocation6], %s838
        %p840 = pneg %p128
        %p841 = pneg %p125
        %p842 = scmp.lt.s32.totalorder %s53, 1
        %s843 = scalar_select %p842, %s53, 1
        %s844 = smul.addr %s843, 3
        %s845 = scalar_lea.vmem %s3, %s844
        %p846 = pneg %p154
        %p847 = pneg %p151
        %s848 = sand.u32 %s48, 1
        %s849 = scalar_lea.sflag [#allocation7], %s848
        %s850 = sand.u32 %s167, 1
        %s851 = smul.addr %s850, 64
        %s852 = scalar_lea.vmem [#allocation8], %s851
        %p853 = pneg %p180
        %p854 = pneg %p177
        %p855 = scmp.lt.s32.totalorder %s53, 1
        %s856 = scalar_select %p855, %s53, 1
        %s857 = scalar_lea.vmem %s5, %s856
        %p858 = pneg %p206
        %p859 = pneg %p203
        %p860 = scmp.lt.s32.totalorder %s53, 1
        %s861 = scalar_select %p860, %s53, 1
        %s862 = scalar_lea.vmem %s6, %s861
        %p863 = pneg %p232
        %p864 = pneg %p229
        %s865 = sand.u32 %s48, 1
        %s866 = scalar_lea.sflag [#allocation10], %s865
        %s867 = sand.u32 %s245, 1
        %s868 = scalar_lea.vmem [#allocation9], %s867
        %p869 = pneg %p258
        %p870 = pneg %p255
        %s871 = sand.u32 %s48, 1
        %s872 = scalar_lea.sflag [#allocation10], %s871
        %s873 = sand.u32 %s271, 1
        %s874 = smul.addr %s873, 128
        %s875 = scalar_lea.vmem [#allocation11], %s874
        %p876 = pneg %p284
        %p877 = pneg %p281
        %s878 = sand.u32 %s48, 1
        %s879 = scalar_lea.sflag [#allocation13], %s878
        %s880 = sand.u32 %s297, 1
        %s881 = smul.addr %s880, 2
        %s882 = scalar_lea.vmem [#allocation12], %s881
        %p883 = pneg %p310
        %p884 = pneg %p307
        %s885 = sand.u32 %s48, 1
        %s886 = scalar_lea.sflag [#allocation13], %s885
        %s887 = sand.u32 %s323, 1
        %s888 = smul.addr %s887, 128
        %s889 = scalar_lea.vmem [#allocation14], %s888
        %p890 = pneg %p336
        %p891 = pneg %p333
        %s892 = sand.u32 %s48, 1
        %s893 = scalar_lea.sflag [#allocation16], %s892
        %s894 = sand.u32 %s349, 1
        %s895 = scalar_lea.vmem [#allocation15], %s894
        %p896 = pneg %p362
        %p897 = pneg %p359
        %s898 = sand.u32 %s48, 1
        %s899 = scalar_lea.sflag [#allocation16], %s898
        %s900 = sand.u32 %s375, 1
        %s901 = scalar_lea.vmem [#allocation17], %s900
        %p902 = pneg %p388
        %p903 = pneg %p385
        %s904 = sand.u32 %s48, 1
        %s905 = scalar_lea.sflag [#allocation19], %s904
        %s906 = sand.u32 %s401, 1
        %s907 = scalar_lea.vmem [#allocation18], %s906
        %p908 = pneg %p414
        %p909 = pneg %p411
        %p910 = pneg %p435
        %p911 = pneg %p432
        %p912 = pneg %p456
        %p913 = pneg %p453
        %p914 = pneg %p482
        %p915 = pneg %p479
        %s916 = sand.u32 %s469, 1
        %s917 = scalar_lea.sflag [#allocation5], %s916
        %s918 = sand.u32 %s469, 1
        %s919 = smul.addr %s918, 16
        %s920 = scalar_lea.vmem [#allocation21], %s919
        %p921 = scmp.lt.s32.totalorder %s53, 1
        %s922 = scalar_select %p921, %s53, 1
        %s923 = smul.addr %s922, 3
        %s924 = scalar_lea.vmem %s3, %s923
        %p925 = scmp.lt.s32.totalorder %s53, 1
        %s926 = scalar_select %p925, %s53, 1
        %s927 = scalar_lea.vmem %s5, %s926
        %p928 = scmp.lt.s32.totalorder %s53, 1
        %s929 = scalar_select %p928, %s53, 1
        %s930 = scalar_lea.vmem %s6, %s929
        %p932 = scmp.eq.s32.totalorder %s53, 0
        // Predicated region
        $region129: #{adapted_transformer_encoder.1} parent=83 // pred_check
          %p933 = pneg %p932
        $region130: #{adapted_transformer_encoder.1} parent=83 // pred_check_branch
          %935 = sbr.rel (%p933) target = $region132
        $region131: #{adapted_transformer_encoder.1} parent=83 // pred_region
          %v936 = vld [vmem:[%s740] sm:$0xff]
          %v937 = vld [vmem:[%s740 + $0x8] sm:$0xff]
          %v938 = vld [vmem:[%s1] sm:$0xff]
          %v939 = vld [vmem:[%s1 + $0x8] sm:$0xff]
          %v940 = vadd.f32 %v936, %v938
          %v941 = vadd.f32 %v937, %v939
          %942 = vst [vmem:[#allocation2] sm:$0xff] %v940
          %943 = vst [vmem:[#allocation2 + $0x8] sm:$0xff] %v941
        $region132: #{adapted_transformer_encoder.1} parent=83 // pred_fallthru
          _
        %v944 = vld [vmem:[#allocation2] sm:$0xff]
        %v945 = vld [vmem:[#allocation2 + $0x8] sm:$0xff]
        %v946 = vpack.c.bf16 %v945, %v944
        %v947 = vld [vmem:[%s749] sm:$0xff]
        %v948 = vld [vmem:[%s749 + $0x8] sm:$0xf]
        %v949 = vld [vmem:[%s749 + $0xc] sm:$0xff]
        %v950 = vld [vmem:[%s749 + $0x14] sm:$0xf]
        %v951 = vld [vmem:[%s749 + $0x18] sm:$0xff]
        %v952 = vld [vmem:[%s749 + $0x20] sm:$0xf]
        %v953 = vld [vmem:[%s749 + $0x24] sm:$0xff]
        %v954 = vld [vmem:[%s749 + $0x2c] sm:$0xf]
        %v955 = vld [vmem:[%s749 + $0x30] sm:$0xff]
        %v956 = vld [vmem:[%s749 + $0x38] sm:$0xf]
        %v957 = vld [vmem:[%s749 + $0x3c] sm:$0xff]
        %v958 = vld [vmem:[%s749 + $0x44] sm:$0xf]
        %v959 = vld [vmem:[%s749 + $0x48] sm:$0xff]
        %v960 = vld [vmem:[%s749 + $0x50] sm:$0xf]
        %v961 = vld [vmem:[%s749 + $0x54] sm:$0xff]
        %v962 = vld [vmem:[%s749 + $0x5c] sm:$0xf]
        %v963 = vld [vmem:[%s749 + $0x60] sm:$0xff]
        %v964 = vld [vmem:[%s749 + $0x68] sm:$0xf]
        %v965 = vld [vmem:[%s749 + $0x6c] sm:$0xff]
        %v966 = vld [vmem:[%s749 + $0x74] sm:$0xf]
        %v967 = vld [vmem:[%s749 + $0x78] sm:$0xff]
        %v968 = vld [vmem:[%s749 + $0x80] sm:$0xf]
        %v969 = vld [vmem:[%s749 + $0x84] sm:$0xff]
        %v970 = vld [vmem:[%s749 + $0x8c] sm:$0xf]
        %v971 = vld [vmem:[%s749 + $0x90] sm:$0xff]
        %v972 = vld [vmem:[%s749 + $0x98] sm:$0xf]
        %v973 = vld [vmem:[%s749 + $0x9c] sm:$0xff]
        %v974 = vld [vmem:[%s749 + $0xa4] sm:$0xf]
        %v975 = vld [vmem:[%s749 + $0xa8] sm:$0xff]
        %v976 = vld [vmem:[%s749 + $0xb0] sm:$0xf]
        %v977 = vld [vmem:[%s749 + $0xb4] sm:$0xff]
        %v978 = vld [vmem:[%s749 + $0xbc] sm:$0xf]
        %v979 = vld [vmem:[%s924] sm:$0x7]
        %v981 = vlaneseq
        %v982 = vshrl.u32 %v981, 7
        %v983 = vsub.s32 0, %v982
        %v984 = vrot.slane %v979, %v983
        %v985 = vlaneseq
        %v986 = vshrl.u32 %v985, 7
        %v987 = vsub.s32 1, %v986
        %v988 = vrot.slane %v979, %v987
        %v989 = vlaneseq
        %v990 = vshrl.u32 %v989, 7
        %v991 = vsub.s32 2, %v990
        %v992 = vrot.slane %v979, %v991
        %v1028 = vunpack.c.l.b16 %v947
        %v1029 = vunpack.c.h.b16 %v947
        %v1030 = vunpack.c.l.b16 %v948
        %v1031 = vunpack.c.l.b16 %v949
        %v1032 = vunpack.c.h.b16 %v949
        %v1033 = vunpack.c.l.b16 %v950
        %v1034 = vunpack.c.l.b16 %v951
        %v1035 = vunpack.c.h.b16 %v951
        %v1036 = vunpack.c.l.b16 %v952
        %v1037 = vunpack.c.l.b16 %v953
        %v1038 = vunpack.c.h.b16 %v953
        %v1039 = vunpack.c.l.b16 %v954
        %v1040 = vunpack.c.l.b16 %v955
        %v1041 = vunpack.c.h.b16 %v955
        %v1042 = vunpack.c.l.b16 %v956
        %v1043 = vunpack.c.l.b16 %v957
        %v1044 = vunpack.c.h.b16 %v957
        %v1045 = vunpack.c.l.b16 %v958
        %v1046 = vunpack.c.l.b16 %v959
        %v1047 = vunpack.c.h.b16 %v959
        %v1048 = vunpack.c.l.b16 %v960
        %v1049 = vunpack.c.l.b16 %v961
        %v1050 = vunpack.c.h.b16 %v961
        %v1051 = vunpack.c.l.b16 %v962
        %v1052 = vunpack.c.l.b16 %v963
        %v1053 = vunpack.c.h.b16 %v963
        %v1054 = vunpack.c.l.b16 %v964
        %v1055 = vunpack.c.l.b16 %v965
        %v1056 = vunpack.c.h.b16 %v965
        %v1057 = vunpack.c.l.b16 %v966
        %v1058 = vunpack.c.l.b16 %v967
        %v1059 = vunpack.c.h.b16 %v967
        %v1060 = vunpack.c.l.b16 %v968
        %v1061 = vunpack.c.l.b16 %v969
        %v1062 = vunpack.c.h.b16 %v969
        %v1063 = vunpack.c.l.b16 %v970
        %v1064 = vunpack.c.l.b16 %v971
        %v1065 = vunpack.c.h.b16 %v971
        %v1066 = vunpack.c.l.b16 %v972
        %v1067 = vunpack.c.l.b16 %v973
        %v1068 = vunpack.c.h.b16 %v973
        %v1069 = vunpack.c.l.b16 %v974
        %v1070 = vunpack.c.l.b16 %v975
        %v1071 = vunpack.c.h.b16 %v975
        %v1072 = vunpack.c.l.b16 %v976
        %v1073 = vunpack.c.l.b16 %v977
        %v1074 = vunpack.c.h.b16 %v977
        %v1075 = vunpack.c.l.b16 %v978
        %v1076 = vpack.c.b16 %v1031, %v1028
        %v1077 = vpack.c.b16 %v1032, %v1029
        %v1078 = vpack.c.b16 %v1033, %v1030
        %v1079 = vpack.c.b16 %v1037, %v1034
        %v1080 = vpack.c.b16 %v1038, %v1035
        %v1081 = vpack.c.b16 %v1039, %v1036
        %v1082 = vpack.c.b16 %v1043, %v1040
        %v1083 = vpack.c.b16 %v1044, %v1041
        %v1084 = vpack.c.b16 %v1045, %v1042
        %v1085 = vpack.c.b16 %v1049, %v1046
        %v1086 = vpack.c.b16 %v1050, %v1047
        %v1087 = vpack.c.b16 %v1051, %v1048
        %v1088 = vpack.c.b16 %v1055, %v1052
        %v1089 = vpack.c.b16 %v1056, %v1053
        %v1090 = vpack.c.b16 %v1057, %v1054
        %v1091 = vpack.c.b16 %v1061, %v1058
        %v1092 = vpack.c.b16 %v1062, %v1059
        %v1093 = vpack.c.b16 %v1063, %v1060
        %v1094 = vpack.c.b16 %v1067, %v1064
        %v1095 = vpack.c.b16 %v1068, %v1065
        %v1096 = vpack.c.b16 %v1069, %v1066
        %v1097 = vpack.c.b16 %v1073, %v1070
        %v1098 = vpack.c.b16 %v1074, %v1071
        %v1099 = vpack.c.b16 %v1075, %v1072
        %1124 = vmatprep.subr.bf16.mxu0 %v1098
        %1125 = vmatpush1.bf16.msra.mxu0 %v1097
        %1126 = vmatprep.subr.bf16.mxu0 %v1095
        %1127 = vmatpush1.bf16.msra.mxu0 %v1094
        %1128 = vmatprep.subr.bf16.mxu0 %v1092
        %1129 = vmatpush1.bf16.msra.mxu0 %v1091
        %1130 = vmatprep.subr.bf16.mxu0 %v1089
        %1131 = vmatpush1.bf16.msra.mxu0 %v1088
        %1132 = vmatprep.subr.bf16.mxu0 %v1086
        %1133 = vmatpush1.bf16.msra.mxu0 %v1085
        %1134 = vmatprep.subr.bf16.mxu0 %v1083
        %1135 = vmatpush1.bf16.msra.mxu0 %v1082
        %1136 = vmatprep.subr.bf16.mxu0 %v1080
        %1137 = vmatpush1.bf16.msra.mxu0 %v1079
        %1138 = vmatprep.subr.bf16.mxu0 %v1077
        %1139 = vmatpush1.bf16.msra.mxu0 %v1076
        %1140 = vmatprep.subr.bf16.mxu0 0
        %1141 = vmatpush2.bf16.msra.mxu0 0
        %1142 = vmatprep.subr.bf16.mxu0 0
        %1143 = vmatpush2.bf16.msra.mxu0 0
        %1144 = vmatprep.subr.bf16.mxu0 0
        %1145 = vmatpush2.bf16.msra.mxu0 0
        %1146 = vmatprep.subr.bf16.mxu0 0
        %1147 = vmatpush2.bf16.msra.mxu0 0
        %1148 = vmatprep.subr.bf16.mxu0 0
        %1149 = vmatpush2.bf16.msra.mxu0 0
        %1150 = vmatprep.subr.bf16.mxu0 0
        %1151 = vmatpush2.bf16.msra.mxu0 0
        %1152 = vmatprep.subr.bf16.mxu0 0
        %1153 = vmatpush2.bf16.msra.mxu0 0
        %1154 = vmatprep.subr.bf16.mxu0 0
        %1155 = vmatpush2.bf16.msra.mxu0 0
        %1156 = vmatprep.mubr.bf16.mxu0 0
        %1157 = vmatmul.mubr.bf16.gmra.mxu0 %v946
        %v1158 = vpop.f32.mrf.mxu0
        %v1159 = vadd.f32 %v984, %v1158
        %v1160 = vpop.f32.mrf.mxu0
        %v1161 = vadd.f32 %v988, %v1160
        %v1162 = vpop.f32.mrf.mxu0
        %v1163 = vadd.f32 %v984, %v1162
        %v1164 = vpop.f32.mrf.mxu0
        %v1165 = vadd.f32 %v988, %v1164
        %1166 = vdwg.mxu0
        %1167 = vmatprep.subr.bf16.mxu0 0
        %1168 = vmatpush1.bf16.msra.mxu0 %v1099
        %1169 = vmatprep.subr.bf16.mxu0 0
        %1170 = vmatpush1.bf16.msra.mxu0 %v1096
        %1171 = vmatprep.subr.bf16.mxu0 0
        %1172 = vmatpush1.bf16.msra.mxu0 %v1093
        %1173 = vmatprep.subr.bf16.mxu0 0
        %1174 = vmatpush1.bf16.msra.mxu0 %v1090
        %1175 = vmatprep.subr.bf16.mxu0 0
        %1176 = vmatpush1.bf16.msra.mxu0 %v1087
        %1177 = vmatprep.subr.bf16.mxu0 0
        %1178 = vmatpush1.bf16.msra.mxu0 %v1084
        %1179 = vmatprep.subr.bf16.mxu0 0
        %1180 = vmatpush1.bf16.msra.mxu0 %v1081
        %1181 = vmatprep.subr.bf16.mxu0 0
        %1182 = vmatpush1.bf16.msra.mxu0 %v1078
        %1183 = vmatprep.subr.bf16.mxu0 0
        %1184 = vmatpush2.bf16.msra.mxu0 0
        %1185 = vmatprep.subr.bf16.mxu0 0
        %1186 = vmatpush2.bf16.msra.mxu0 0
        %1187 = vmatprep.subr.bf16.mxu0 0
        %1188 = vmatpush2.bf16.msra.mxu0 0
        %1189 = vmatprep.subr.bf16.mxu0 0
        %1190 = vmatpush2.bf16.msra.mxu0 0
        %1191 = vmatprep.subr.bf16.mxu0 0
        %1192 = vmatpush2.bf16.msra.mxu0 0
        %1193 = vmatprep.subr.bf16.mxu0 0
        %1194 = vmatpush2.bf16.msra.mxu0 0
        %1195 = vmatprep.subr.bf16.mxu0 0
        %1196 = vmatpush2.bf16.msra.mxu0 0
        %1197 = vmatprep.subr.bf16.mxu0 0
        %1198 = vmatpush2.bf16.msra.mxu0 0
        %1199 = vmatprep.mubr.bf16.mxu0 0
        %1200 = vmatmul.mubr.bf16.gmra.mxu0 %v946
        %v1201 = vpop.f32.mrf.mxu0
        %v1202 = vadd.f32 %v992, %v1201
        %v1203 = vpop.f32.mrf.mxu0
        %v1204 = vpop.f32.mrf.mxu0
        %v1205 = vadd.f32 %v992, %v1204
        %v1206 = vpop.f32.mrf.mxu0
        %1207 = vdwg.mxu0
        %1210 = vrot.lane.b32.xlu0 %v1159, 96
        %v1211 = vpop.permute.xlu0 %1210
        %1212 = vrot.lane.b32.xlu0 %v1163, 96
        %v1213 = vpop.permute.xlu0 %1212
        %1216 = vrot.lane.b32.xlu0 %v1159, 64
        %v1217 = vpop.permute.xlu0 %1216
        %1218 = vrot.lane.b32.xlu0 %v1163, 64
        %v1219 = vpop.permute.xlu0 %1218
        %1222 = vrot.lane.b32.xlu0 %v1159, 32
        %v1223 = vpop.permute.xlu0 %1222
        %1224 = vrot.lane.b32.xlu0 %v1163, 32
        %v1225 = vpop.permute.xlu0 %1224
        %v1228 = vpack.c.bf16 %v1163, %v1159
        %v1229 = vpack.c.bf16 %v1213, %v1211
        %v1230 = vpack.c.bf16 %v1219, %v1217
        %v1231 = vpack.c.bf16 %v1225, %v1223
        %1234 = vrot.lane.b32.xlu0 %v1161, 96
        %v1235 = vpop.permute.xlu0 %1234
        %1236 = vrot.lane.b32.xlu0 %v1165, 96
        %v1237 = vpop.permute.xlu0 %1236
        %1240 = vrot.lane.b32.xlu0 %v1161, 64
        %v1241 = vpop.permute.xlu0 %1240
        %1242 = vrot.lane.b32.xlu0 %v1165, 64
        %v1243 = vpop.permute.xlu0 %1242
        %1246 = vrot.lane.b32.xlu0 %v1161, 32
        %v1247 = vpop.permute.xlu0 %1246
        %1248 = vrot.lane.b32.xlu0 %v1165, 32
        %v1249 = vpop.permute.xlu0 %1248
        %v1252 = vpack.c.bf16 %v1165, %v1161
        %v1253 = vpack.c.bf16 %v1237, %v1235
        %v1254 = vpack.c.bf16 %v1243, %v1241
        %v1255 = vpack.c.bf16 %v1249, %v1247
        %1258 = vrot.lane.b32.xlu0 %v1202, 96
        %v1259 = vpop.permute.xlu0 %1258
        %1260 = vrot.lane.b32.xlu0 %v1205, 96
        %v1261 = vpop.permute.xlu0 %1260
        %1264 = vrot.lane.b32.xlu0 %v1202, 64
        %v1265 = vpop.permute.xlu0 %1264
        %1266 = vrot.lane.b32.xlu0 %v1205, 64
        %v1267 = vpop.permute.xlu0 %1266
        %1270 = vrot.lane.b32.xlu0 %v1202, 32
        %v1271 = vpop.permute.xlu0 %1270
        %1272 = vrot.lane.b32.xlu0 %v1205, 32
        %v1273 = vpop.permute.xlu0 %1272
        %v1276 = vpack.c.bf16 %v1205, %v1202
        %v1277 = vpack.c.bf16 %v1261, %v1259
        %v1278 = vpack.c.bf16 %v1267, %v1265
        %v1279 = vpack.c.bf16 %v1273, %v1271
        %vm1280 = vcmask 261120
        %v1282 = vsel %vm1280, %v1228, 0
        %v1285 = vsel %vm1280, %v1252, 0
        %1287 = vmatprep.subr.bf16.mxu0 0
        %1288 = vmatpush1.bf16.xpose.msra.mxu0 0
        %1289 = vmatprep.subr.bf16.mxu0 0
        %1290 = vmatpush1.bf16.xpose.msra.mxu0 0
        %1291 = vmatprep.subr.bf16.mxu0 0
        %1292 = vmatpush1.bf16.xpose.msra.mxu0 0
        %1293 = vmatprep.subr.bf16.mxu0 0
        %1294 = vmatpush1.bf16.xpose.msra.mxu0 0
        %1295 = vmatprep.subr.bf16.mxu0 0
        %1296 = vmatpush1.bf16.xpose.msra.mxu0 0
        %1297 = vmatprep.subr.bf16.mxu0 0
        %1298 = vmatpush1.bf16.xpose.msra.mxu0 0
        %1299 = vmatprep.subr.bf16.mxu0 0
        %1300 = vmatpush1.bf16.xpose.msra.mxu0 0
        %1301 = vmatprep.subr.bf16.mxu0 0
        %1302 = vmatpush1.bf16.xpose.msra.mxu0 %v1285
        %1303 = vmatprep.subr.bf16.mxu0 0
        %1304 = vmatpush2.bf16.xpose.msra.mxu0 0
        %1305 = vmatprep.subr.bf16.mxu0 0
        %1306 = vmatpush2.bf16.xpose.msra.mxu0 0
        %1307 = vmatprep.subr.bf16.mxu0 0
        %1308 = vmatpush2.bf16.xpose.msra.mxu0 0
        %1309 = vmatprep.subr.bf16.mxu0 0
        %1310 = vmatpush2.bf16.xpose.msra.mxu0 0
        %1311 = vmatprep.subr.bf16.mxu0 0
        %1312 = vmatpush2.bf16.xpose.msra.mxu0 0
        %1313 = vmatprep.subr.bf16.mxu0 0
        %1314 = vmatpush2.bf16.xpose.msra.mxu0 0
        %1315 = vmatprep.subr.bf16.mxu0 0
        %1316 = vmatpush2.bf16.xpose.msra.mxu0 0
        %1317 = vmatprep.subr.bf16.mxu0 0
        %1318 = vmatpush2.bf16.xpose.msra.mxu0 0
        %1319 = vmatprep.mubr.bf16.mxu0 0
        %1320 = vmatmul.mubr.bf16.gmra.mxu0 %v1282
        %v1321 = vpop.f32.mrf.mxu0
        %v1322 = vadd.f32 0.0, %v1321
        %v1323 = vpop.f32.mrf.mxu0
        %v1324 = vpop.f32.mrf.mxu0
        %v1325 = vadd.f32 0.0, %v1324
        %v1326 = vpop.f32.mrf.mxu0
        %1327 = vdwg.mxu0
        %v1329 = vsel %vm1280, %v1229, 0
        %v1332 = vsel %vm1280, %v1253, 0
        %1334 = vmatprep.subr.bf16.mxu0 0
        %1335 = vmatpush1.bf16.xpose.msra.mxu0 0
        %1336 = vmatprep.subr.bf16.mxu0 0
        %1337 = vmatpush1.bf16.xpose.msra.mxu0 0
        %1338 = vmatprep.subr.bf16.mxu0 0
        %1339 = vmatpush1.bf16.xpose.msra.mxu0 0
        %1340 = vmatprep.subr.bf16.mxu0 0
        %1341 = vmatpush1.bf16.xpose.msra.mxu0 0
        %1342 = vmatprep.subr.bf16.mxu0 0
        %1343 = vmatpush1.bf16.xpose.msra.mxu0 0
        %1344 = vmatprep.subr.bf16.mxu0 0
        %1345 = vmatpush1.bf16.xpose.msra.mxu0 0
        %1346 = vmatprep.subr.bf16.mxu0 0
        %1347 = vmatpush1.bf16.xpose.msra.mxu0 0
        %1348 = vmatprep.subr.bf16.mxu0 0
        %1349 = vmatpush1.bf16.xpose.msra.mxu0 %v1332
        %1350 = vmatprep.subr.bf16.mxu0 0
        %1351 = vmatpush2.bf16.xpose.msra.mxu0 0
        %1352 = vmatprep.subr.bf16.mxu0 0
        %1353 = vmatpush2.bf16.xpose.msra.mxu0 0
        %1354 = vmatprep.subr.bf16.mxu0 0
        %1355 = vmatpush2.bf16.xpose.msra.mxu0 0
        %1356 = vmatprep.subr.bf16.mxu0 0
        %1357 = vmatpush2.bf16.xpose.msra.mxu0 0
        %1358 = vmatprep.subr.bf16.mxu0 0
        %1359 = vmatpush2.bf16.xpose.msra.mxu0 0
        %1360 = vmatprep.subr.bf16.mxu0 0
        %1361 = vmatpush2.bf16.xpose.msra.mxu0 0
        %1362 = vmatprep.subr.bf16.mxu0 0
        %1363 = vmatpush2.bf16.xpose.msra.mxu0 0
        %1364 = vmatprep.subr.bf16.mxu0 0
        %1365 = vmatpush2.bf16.xpose.msra.mxu0 0
        %1366 = vmatprep.mubr.bf16.mxu0 0
        %1367 = vmatmul.mubr.bf16.gmra.mxu0 %v1329
        %v1368 = vpop.f32.mrf.mxu0
        %v1369 = vadd.f32 0.0, %v1368
        %v1370 = vpop.f32.mrf.mxu0
        %v1371 = vpop.f32.mrf.mxu0
        %v1372 = vadd.f32 0.0, %v1371
        %v1373 = vpop.f32.mrf.mxu0
        %1374 = vdwg.mxu0
        %v1376 = vsel %vm1280, %v1230, 0
        %v1379 = vsel %vm1280, %v1254, 0
        %1381 = vmatprep.subr.bf16.mxu0 0
        %1382 = vmatpush1.bf16.xpose.msra.mxu0 0
        %1383 = vmatprep.subr.bf16.mxu0 0
        %1384 = vmatpush1.bf16.xpose.msra.mxu0 0
        %1385 = vmatprep.subr.bf16.mxu0 0
        %1386 = vmatpush1.bf16.xpose.msra.mxu0 0
        %1387 = vmatprep.subr.bf16.mxu0 0
        %1388 = vmatpush1.bf16.xpose.msra.mxu0 0
        %1389 = vmatprep.subr.bf16.mxu0 0
        %1390 = vmatpush1.bf16.xpose.msra.mxu0 0
        %1391 = vmatprep.subr.bf16.mxu0 0
        %1392 = vmatpush1.bf16.xpose.msra.mxu0 0
        %1393 = vmatprep.subr.bf16.mxu0 0
        %1394 = vmatpush1.bf16.xpose.msra.mxu0 0
        %1395 = vmatprep.subr.bf16.mxu0 0
        %1396 = vmatpush1.bf16.xpose.msra.mxu0 %v1379
        %1397 = vmatprep.subr.bf16.mxu0 0
        %1398 = vmatpush2.bf16.xpose.msra.mxu0 0
        %1399 = vmatprep.subr.bf16.mxu0 0
        %1400 = vmatpush2.bf16.xpose.msra.mxu0 0
        %1401 = vmatprep.subr.bf16.mxu0 0
        %1402 = vmatpush2.bf16.xpose.msra.mxu0 0
        %1403 = vmatprep.subr.bf16.mxu0 0
        %1404 = vmatpush2.bf16.xpose.msra.mxu0 0
        %1405 = vmatprep.subr.bf16.mxu0 0
        %1406 = vmatpush2.bf16.xpose.msra.mxu0 0
        %1407 = vmatprep.subr.bf16.mxu0 0
        %1408 = vmatpush2.bf16.xpose.msra.mxu0 0
        %1409 = vmatprep.subr.bf16.mxu0 0
        %1410 = vmatpush2.bf16.xpose.msra.mxu0 0
        %1411 = vmatprep.subr.bf16.mxu0 0
        %1412 = vmatpush2.bf16.xpose.msra.mxu0 0
        %1413 = vmatprep.mubr.bf16.mxu0 0
        %1414 = vmatmul.mubr.bf16.gmra.mxu0 %v1376
        %v1415 = vpop.f32.mrf.mxu0
        %v1416 = vadd.f32 0.0, %v1415
        %v1417 = vpop.f32.mrf.mxu0
        %v1418 = vpop.f32.mrf.mxu0
        %v1419 = vadd.f32 0.0, %v1418
        %v1420 = vpop.f32.mrf.mxu0
        %1421 = vdwg.mxu0
        %v1423 = vsel %vm1280, %v1231, 0
        %v1426 = vsel %vm1280, %v1255, 0
        %1428 = vmatprep.subr.bf16.mxu0 0
        %1429 = vmatpush1.bf16.xpose.msra.mxu0 0
        %1430 = vmatprep.subr.bf16.mxu0 0
        %1431 = vmatpush1.bf16.xpose.msra.mxu0 0
        %1432 = vmatprep.subr.bf16.mxu0 0
        %1433 = vmatpush1.bf16.xpose.msra.mxu0 0
        %1434 = vmatprep.subr.bf16.mxu0 0
        %1435 = vmatpush1.bf16.xpose.msra.mxu0 0
        %1436 = vmatprep.subr.bf16.mxu0 0
        %1437 = vmatpush1.bf16.xpose.msra.mxu0 0
        %1438 = vmatprep.subr.bf16.mxu0 0
        %1439 = vmatpush1.bf16.xpose.msra.mxu0 0
        %1440 = vmatprep.subr.bf16.mxu0 0
        %1441 = vmatpush1.bf16.xpose.msra.mxu0 0
        %1442 = vmatprep.subr.bf16.mxu0 0
        %1443 = vmatpush1.bf16.xpose.msra.mxu0 %v1426
        %1444 = vmatprep.subr.bf16.mxu0 0
        %1445 = vmatpush2.bf16.xpose.msra.mxu0 0
        %1446 = vmatprep.subr.bf16.mxu0 0
        %1447 = vmatpush2.bf16.xpose.msra.mxu0 0
        %1448 = vmatprep.subr.bf16.mxu0 0
        %1449 = vmatpush2.bf16.xpose.msra.mxu0 0
        %1450 = vmatprep.subr.bf16.mxu0 0
        %1451 = vmatpush2.bf16.xpose.msra.mxu0 0
        %1452 = vmatprep.subr.bf16.mxu0 0
        %1453 = vmatpush2.bf16.xpose.msra.mxu0 0
        %1454 = vmatprep.subr.bf16.mxu0 0
        %1455 = vmatpush2.bf16.xpose.msra.mxu0 0
        %1456 = vmatprep.subr.bf16.mxu0 0
        %1457 = vmatpush2.bf16.xpose.msra.mxu0 0
        %1458 = vmatprep.subr.bf16.mxu0 0
        %1459 = vmatpush2.bf16.xpose.msra.mxu0 0
        %1460 = vmatprep.mubr.bf16.mxu0 0
        %1461 = vmatmul.mubr.bf16.gmra.mxu0 %v1423
        %v1462 = vpop.f32.mrf.mxu0
        %v1463 = vadd.f32 0.0, %v1462
        %v1464 = vpop.f32.mrf.mxu0
        %v1465 = vpop.f32.mrf.mxu0
        %v1466 = vadd.f32 0.0, %v1465
        %v1467 = vpop.f32.mrf.mxu0
        %1468 = vdwg.mxu0
        %v1469 = vmul.f32 %v1322, 0.17677669
        %v1470 = vmul.f32 %v1325, 0.17677669
        %v1471 = vmul.f32 %v1369, 0.17677669
        %v1472 = vmul.f32 %v1372, 0.17677669
        %v1473 = vmul.f32 %v1416, 0.17677669
        %v1474 = vmul.f32 %v1419, 0.17677669
        %v1475 = vmul.f32 %v1463, 0.17677669
        %v1476 = vmul.f32 %v1466, 0.17677669
        %vm1477 = vcmask 130048
        %v1478 = vsel %vm1477, %v1469, -inf
        %1479 = vmax.xlane.f32.xlu0 %v1478
        %v1480 = vpop.xlane.xlu0 %1479
        %v1481 = vsel %vm1477, %v1470, -inf
        %1482 = vmax.xlane.f32.xlu0 %v1481
        %v1483 = vpop.xlane.xlu0 %1482
        %v1484 = vsel %vm1477, %v1471, -inf
        %1485 = vmax.xlane.f32.xlu0 %v1484
        %v1486 = vpop.xlane.xlu0 %1485
        %v1487 = vsel %vm1477, %v1472, -inf
        %1488 = vmax.xlane.f32.xlu0 %v1487
        %v1489 = vpop.xlane.xlu0 %1488
        %v1490 = vsel %vm1477, %v1473, -inf
        %1491 = vmax.xlane.f32.xlu0 %v1490
        %v1492 = vpop.xlane.xlu0 %1491
        %v1493 = vsel %vm1477, %v1474, -inf
        %1494 = vmax.xlane.f32.xlu0 %v1493
        %v1495 = vpop.xlane.xlu0 %1494
        %v1496 = vsel %vm1477, %v1475, -inf
        %1497 = vmax.xlane.f32.xlu0 %v1496
        %v1498 = vpop.xlane.xlu0 %1497
        %v1499 = vsel %vm1477, %v1476, -inf
        %1500 = vmax.xlane.f32.xlu0 %v1499
        %v1501 = vpop.xlane.xlu0 %1500
        %v1502 = vsub.f32 %v1469, %v1480
        %v1503 = vsub.f32 %v1470, %v1483
        %v1504 = vsub.f32 %v1471, %v1486
        %v1505 = vsub.f32 %v1472, %v1489
        %v1506 = vsub.f32 %v1473, %v1492
        %v1507 = vsub.f32 %v1474, %v1495
        %v1508 = vsub.f32 %v1475, %v1498
        %v1509 = vsub.f32 %v1476, %v1501
        %v1510 = vmul.f32 %v1502, 1.442695
        %v1511 = vpow.pop %v1510
        %v1512 = vmul.f32 %v1503, 1.442695
        %v1513 = vpow.pop %v1512
        %v1514 = vmul.f32 %v1504, 1.442695
        %v1515 = vpow.pop %v1514
        %v1516 = vmul.f32 %v1505, 1.442695
        %v1517 = vpow.pop %v1516
        %v1518 = vmul.f32 %v1506, 1.442695
        %v1519 = vpow.pop %v1518
        %v1520 = vmul.f32 %v1507, 1.442695
        %v1521 = vpow.pop %v1520
        %v1522 = vmul.f32 %v1508, 1.442695
        %v1523 = vpow.pop %v1522
        %v1524 = vmul.f32 %v1509, 1.442695
        %v1525 = vpow.pop %v1524
        %v1526 = vsel %vm1477, %v1511, 0.0
        %1527 = vadd.xlane.f32.xlu0 %v1526
        %v1528 = vpop.xlane.xlu0 %1527
        %v1529 = vsel %vm1477, %v1513, 0.0
        %1530 = vadd.xlane.f32.xlu0 %v1529
        %v1531 = vpop.xlane.xlu0 %1530
        %v1532 = vsel %vm1477, %v1515, 0.0
        %1533 = vadd.xlane.f32.xlu0 %v1532
        %v1534 = vpop.xlane.xlu0 %1533
        %v1535 = vsel %vm1477, %v1517, 0.0
        %1536 = vadd.xlane.f32.xlu0 %v1535
        %v1537 = vpop.xlane.xlu0 %1536
        %v1538 = vsel %vm1477, %v1519, 0.0
        %1539 = vadd.xlane.f32.xlu0 %v1538
        %v1540 = vpop.xlane.xlu0 %1539
        %v1541 = vsel %vm1477, %v1521, 0.0
        %1542 = vadd.xlane.f32.xlu0 %v1541
        %v1543 = vpop.xlane.xlu0 %1542
        %v1544 = vsel %vm1477, %v1523, 0.0
        %1545 = vadd.xlane.f32.xlu0 %v1544
        %v1546 = vpop.xlane.xlu0 %1545
        %v1547 = vsel %vm1477, %v1525, 0.0
        %1548 = vadd.xlane.f32.xlu0 %v1547
        %v1549 = vpop.xlane.xlu0 %1548
        %v1550 = vrcp.pop %v1528
        %v1551 = vrcp.pop %v1531
        %v1552 = vrcp.pop %v1534
        %v1553 = vrcp.pop %v1537
        %v1554 = vrcp.pop %v1540
        %v1555 = vrcp.pop %v1543
        %v1556 = vrcp.pop %v1546
        %v1557 = vrcp.pop %v1549
        %v1558 = vmul.f32 %v1511, %v1550
        %v1559 = vmul.f32 %v1513, %v1551
        %v1560 = vmul.f32 %v1515, %v1552
        %v1561 = vmul.f32 %v1517, %v1553
        %v1562 = vmul.f32 %v1519, %v1554
        %v1563 = vmul.f32 %v1521, %v1555
        %v1564 = vmul.f32 %v1523, %v1556
        %v1565 = vmul.f32 %v1525, %v1557
        %v1566 = vmax.f32 %v1558, 1e-06
        %v1567 = vmax.f32 %v1559, 1e-06
        %v1568 = vmax.f32 %v1560, 1e-06
        %v1569 = vmax.f32 %v1561, 1e-06
        %v1570 = vmax.f32 %v1562, 1e-06
        %v1571 = vmax.f32 %v1563, 1e-06
        %v1572 = vmax.f32 %v1564, 1e-06
        %v1573 = vmax.f32 %v1565, 1e-06
        %v1574 = vmin.f32 %v1566, 1.0
        %v1575 = vmin.f32 %v1567, 1.0
        %v1576 = vmin.f32 %v1568, 1.0
        %v1577 = vmin.f32 %v1569, 1.0
        %v1578 = vmin.f32 %v1570, 1.0
        %v1579 = vmin.f32 %v1571, 1.0
        %v1580 = vmin.f32 %v1572, 1.0
        %v1581 = vmin.f32 %v1573, 1.0
        %v1582 = vpack.c.bf16 %v1575, %v1574
        %v1583 = vpack.c.bf16 %v1577, %v1576
        %v1584 = vpack.c.bf16 %v1579, %v1578
        %v1585 = vpack.c.bf16 %v1581, %v1580
        %v1587 = vsel %vm1477, %v1582, 0
        %1589 = vmatprep.subr.bf16.mxu0 0
        %1590 = vmatpush1.bf16.msra.mxu0 0
        %1591 = vmatprep.subr.bf16.mxu0 0
        %1592 = vmatpush1.bf16.msra.mxu0 0
        %1593 = vmatprep.subr.bf16.mxu0 0
        %1594 = vmatpush1.bf16.msra.mxu0 0
        %1595 = vmatprep.subr.bf16.mxu0 0
        %1596 = vmatpush1.bf16.msra.mxu0 0
        %1597 = vmatprep.subr.bf16.mxu0 0
        %1598 = vmatpush1.bf16.msra.mxu0 0
        %1599 = vmatprep.subr.bf16.mxu0 0
        %1600 = vmatpush1.bf16.msra.mxu0 0
        %1601 = vmatprep.subr.bf16.mxu0 0
        %1602 = vmatpush1.bf16.msra.mxu0 0
        %1603 = vmatprep.subr.bf16.mxu0 0
        %1604 = vmatpush1.bf16.msra.mxu0 %v1276
        %1605 = vmatprep.subr.bf16.mxu0 0
        %1606 = vmatpush2.bf16.msra.mxu0 0
        %1607 = vmatprep.subr.bf16.mxu0 0
        %1608 = vmatpush2.bf16.msra.mxu0 0
        %1609 = vmatprep.subr.bf16.mxu0 0
        %1610 = vmatpush2.bf16.msra.mxu0 0
        %1611 = vmatprep.subr.bf16.mxu0 0
        %1612 = vmatpush2.bf16.msra.mxu0 0
        %1613 = vmatprep.subr.bf16.mxu0 0
        %1614 = vmatpush2.bf16.msra.mxu0 0
        %1615 = vmatprep.subr.bf16.mxu0 0
        %1616 = vmatpush2.bf16.msra.mxu0 0
        %1617 = vmatprep.subr.bf16.mxu0 0
        %1618 = vmatpush2.bf16.msra.mxu0 0
        %1619 = vmatprep.subr.bf16.mxu0 0
        %1620 = vmatpush2.bf16.msra.mxu0 0
        %1621 = vmatprep.mubr.bf16.mxu0 0
        %1622 = vmatmul.mubr.bf16.gmra.mxu0 %v1587
        %v1623 = vpop.f32.mrf.mxu0
        %v1624 = vadd.f32 0.0, %v1623
        %v1625 = vpop.f32.mrf.mxu0
        %v1626 = vpop.f32.mrf.mxu0
        %v1627 = vadd.f32 0.0, %v1626
        %v1628 = vpop.f32.mrf.mxu0
        %1629 = vdwg.mxu0
        %v1631 = vsel %vm1477, %v1583, 0
        %1633 = vmatprep.subr.bf16.mxu0 0
        %1634 = vmatpush1.bf16.msra.mxu0 0
        %1635 = vmatprep.subr.bf16.mxu0 0
        %1636 = vmatpush1.bf16.msra.mxu0 0
        %1637 = vmatprep.subr.bf16.mxu0 0
        %1638 = vmatpush1.bf16.msra.mxu0 0
        %1639 = vmatprep.subr.bf16.mxu0 0
        %1640 = vmatpush1.bf16.msra.mxu0 0
        %1641 = vmatprep.subr.bf16.mxu0 0
        %1642 = vmatpush1.bf16.msra.mxu0 0
        %1643 = vmatprep.subr.bf16.mxu0 0
        %1644 = vmatpush1.bf16.msra.mxu0 0
        %1645 = vmatprep.subr.bf16.mxu0 0
        %1646 = vmatpush1.bf16.msra.mxu0 0
        %1647 = vmatprep.subr.bf16.mxu0 0
        %1648 = vmatpush1.bf16.msra.mxu0 %v1277
        %1649 = vmatprep.subr.bf16.mxu0 0
        %1650 = vmatpush2.bf16.msra.mxu0 0
        %1651 = vmatprep.subr.bf16.mxu0 0
        %1652 = vmatpush2.bf16.msra.mxu0 0
        %1653 = vmatprep.subr.bf16.mxu0 0
        %1654 = vmatpush2.bf16.msra.mxu0 0
        %1655 = vmatprep.subr.bf16.mxu0 0
        %1656 = vmatpush2.bf16.msra.mxu0 0
        %1657 = vmatprep.subr.bf16.mxu0 0
        %1658 = vmatpush2.bf16.msra.mxu0 0
        %1659 = vmatprep.subr.bf16.mxu0 0
        %1660 = vmatpush2.bf16.msra.mxu0 0
        %1661 = vmatprep.subr.bf16.mxu0 0
        %1662 = vmatpush2.bf16.msra.mxu0 0
        %1663 = vmatprep.subr.bf16.mxu0 0
        %1664 = vmatpush2.bf16.msra.mxu0 0
        %1665 = vmatprep.mubr.bf16.mxu0 0
        %1666 = vmatmul.mubr.bf16.gmra.mxu0 %v1631
        %v1667 = vpop.f32.mrf.mxu0
        %v1668 = vadd.f32 0.0, %v1667
        %v1669 = vpop.f32.mrf.mxu0
        %v1670 = vpop.f32.mrf.mxu0
        %v1671 = vadd.f32 0.0, %v1670
        %v1672 = vpop.f32.mrf.mxu0
        %1673 = vdwg.mxu0
        %v1675 = vsel %vm1477, %v1584, 0
        %1677 = vmatprep.subr.bf16.mxu0 0
        %1678 = vmatpush1.bf16.msra.mxu0 0
        %1679 = vmatprep.subr.bf16.mxu0 0
        %1680 = vmatpush1.bf16.msra.mxu0 0
        %1681 = vmatprep.subr.bf16.mxu0 0
        %1682 = vmatpush1.bf16.msra.mxu0 0
        %1683 = vmatprep.subr.bf16.mxu0 0
        %1684 = vmatpush1.bf16.msra.mxu0 0
        %1685 = vmatprep.subr.bf16.mxu0 0
        %1686 = vmatpush1.bf16.msra.mxu0 0
        %1687 = vmatprep.subr.bf16.mxu0 0
        %1688 = vmatpush1.bf16.msra.mxu0 0
        %1689 = vmatprep.subr.bf16.mxu0 0
        %1690 = vmatpush1.bf16.msra.mxu0 0
        %1691 = vmatprep.subr.bf16.mxu0 0
        %1692 = vmatpush1.bf16.msra.mxu0 %v1278
        %1693 = vmatprep.subr.bf16.mxu0 0
        %1694 = vmatpush2.bf16.msra.mxu0 0
        %1695 = vmatprep.subr.bf16.mxu0 0
        %1696 = vmatpush2.bf16.msra.mxu0 0
        %1697 = vmatprep.subr.bf16.mxu0 0
        %1698 = vmatpush2.bf16.msra.mxu0 0
        %1699 = vmatprep.subr.bf16.mxu0 0
        %1700 = vmatpush2.bf16.msra.mxu0 0
        %1701 = vmatprep.subr.bf16.mxu0 0
        %1702 = vmatpush2.bf16.msra.mxu0 0
        %1703 = vmatprep.subr.bf16.mxu0 0
        %1704 = vmatpush2.bf16.msra.mxu0 0
        %1705 = vmatprep.subr.bf16.mxu0 0
        %1706 = vmatpush2.bf16.msra.mxu0 0
        %1707 = vmatprep.subr.bf16.mxu0 0
        %1708 = vmatpush2.bf16.msra.mxu0 0
        %1709 = vmatprep.mubr.bf16.mxu0 0
        %1710 = vmatmul.mubr.bf16.gmra.mxu0 %v1675
        %v1711 = vpop.f32.mrf.mxu0
        %v1712 = vadd.f32 0.0, %v1711
        %v1713 = vpop.f32.mrf.mxu0
        %v1714 = vpop.f32.mrf.mxu0
        %v1715 = vadd.f32 0.0, %v1714
        %v1716 = vpop.f32.mrf.mxu0
        %1717 = vdwg.mxu0
        %v1719 = vsel %vm1477, %v1585, 0
        %1721 = vmatprep.subr.bf16.mxu0 0
        %1722 = vmatpush1.bf16.msra.mxu0 0
        %1723 = vmatprep.subr.bf16.mxu0 0
        %1724 = vmatpush1.bf16.msra.mxu0 0
        %1725 = vmatprep.subr.bf16.mxu0 0
        %1726 = vmatpush1.bf16.msra.mxu0 0
        %1727 = vmatprep.subr.bf16.mxu0 0
        %1728 = vmatpush1.bf16.msra.mxu0 0
        %1729 = vmatprep.subr.bf16.mxu0 0
        %1730 = vmatpush1.bf16.msra.mxu0 0
        %1731 = vmatprep.subr.bf16.mxu0 0
        %1732 = vmatpush1.bf16.msra.mxu0 0
        %1733 = vmatprep.subr.bf16.mxu0 0
        %1734 = vmatpush1.bf16.msra.mxu0 0
        %1735 = vmatprep.subr.bf16.mxu0 0
        %1736 = vmatpush1.bf16.msra.mxu0 %v1279
        %1737 = vmatprep.subr.bf16.mxu0 0
        %1738 = vmatpush2.bf16.msra.mxu0 0
        %1739 = vmatprep.subr.bf16.mxu0 0
        %1740 = vmatpush2.bf16.msra.mxu0 0
        %1741 = vmatprep.subr.bf16.mxu0 0
        %1742 = vmatpush2.bf16.msra.mxu0 0
        %1743 = vmatprep.subr.bf16.mxu0 0
        %1744 = vmatpush2.bf16.msra.mxu0 0
        %1745 = vmatprep.subr.bf16.mxu0 0
        %1746 = vmatpush2.bf16.msra.mxu0 0
        %1747 = vmatprep.subr.bf16.mxu0 0
        %1748 = vmatpush2.bf16.msra.mxu0 0
        %1749 = vmatprep.subr.bf16.mxu0 0
        %1750 = vmatpush2.bf16.msra.mxu0 0
        %1751 = vmatprep.subr.bf16.mxu0 0
        %1752 = vmatpush2.bf16.msra.mxu0 0
        %1753 = vmatprep.mubr.bf16.mxu0 0
        %1754 = vmatmul.mubr.bf16.gmra.mxu0 %v1719
        %v1755 = vpop.f32.mrf.mxu0
        %v1756 = vadd.f32 0.0, %v1755
        %v1757 = vpop.f32.mrf.mxu0
        %v1758 = vpop.f32.mrf.mxu0
        %v1759 = vadd.f32 0.0, %v1758
        %v1760 = vpop.f32.mrf.mxu0
        %1761 = vdwg.mxu0
        %v1762 = vpack.c.bf16 %v1627, %v1624
        %v1763 = vpack.c.bf16 %v1671, %v1668
        %v1764 = vpack.c.bf16 %v1715, %v1712
        %v1765 = vpack.c.bf16 %v1759, %v1756
        %v1766 = vld [vmem:[%s758] sm:$0xf]
        %v1767 = vld [vmem:[%s758 + $0x4] sm:$0xf]
        %v1768 = vld [vmem:[%s758 + $0x8] sm:$0xf]
        %v1769 = vld [vmem:[%s758 + $0xc] sm:$0xf]
        %v1770 = vld [vmem:[%s758 + $0x10] sm:$0xf]
        %v1771 = vld [vmem:[%s758 + $0x14] sm:$0xf]
        %v1772 = vld [vmem:[%s758 + $0x18] sm:$0xf]
        %v1773 = vld [vmem:[%s758 + $0x1c] sm:$0xf]
        %v1774 = vld [vmem:[%s758 + $0x20] sm:$0xf]
        %v1775 = vld [vmem:[%s758 + $0x24] sm:$0xf]
        %v1776 = vld [vmem:[%s758 + $0x28] sm:$0xf]
        %v1777 = vld [vmem:[%s758 + $0x2c] sm:$0xf]
        %v1778 = vld [vmem:[%s758 + $0x30] sm:$0xf]
        %v1779 = vld [vmem:[%s758 + $0x34] sm:$0xf]
        %v1780 = vld [vmem:[%s758 + $0x38] sm:$0xf]
        %v1781 = vld [vmem:[%s758 + $0x3c] sm:$0xf]
        %v1786 = vunpack.c.l.b16 %v1766
        %v1787 = vunpack.c.l.b16 %v1767
        %v1788 = vunpack.c.l.b16 %v1768
        %v1789 = vunpack.c.l.b16 %v1769
        %v1790 = vpack.c.b16 %v1787, %v1786
        %v1791 = vpack.c.b16 %v1789, %v1788
        %v1795 = vsel %vm1280, %v1762, 0
        %1797 = vmatprep.subr.bf16.mxu0 0
        %1798 = vmatpush1.bf16.msra.mxu0 0
        %1799 = vmatprep.subr.bf16.mxu0 0
        %1800 = vmatpush1.bf16.msra.mxu0 0
        %1801 = vmatprep.subr.bf16.mxu0 0
        %1802 = vmatpush1.bf16.msra.mxu0 0
        %1803 = vmatprep.subr.bf16.mxu0 0
        %1804 = vmatpush1.bf16.msra.mxu0 0
        %1805 = vmatprep.subr.bf16.mxu0 0
        %1806 = vmatpush1.bf16.msra.mxu0 0
        %1807 = vmatprep.subr.bf16.mxu0 0
        %1808 = vmatpush1.bf16.msra.mxu0 0
        %1809 = vmatprep.subr.bf16.mxu0 0
        %1810 = vmatpush1.bf16.msra.mxu0 %v1791
        %1811 = vmatprep.subr.bf16.mxu0 0
        %1812 = vmatpush1.bf16.msra.mxu0 %v1790
        %1813 = vmatprep.subr.bf16.mxu0 0
        %1814 = vmatpush2.bf16.msra.mxu0 0
        %1815 = vmatprep.subr.bf16.mxu0 0
        %1816 = vmatpush2.bf16.msra.mxu0 0
        %1817 = vmatprep.subr.bf16.mxu0 0
        %1818 = vmatpush2.bf16.msra.mxu0 0
        %1819 = vmatprep.subr.bf16.mxu0 0
        %1820 = vmatpush2.bf16.msra.mxu0 0
        %1821 = vmatprep.subr.bf16.mxu0 0
        %1822 = vmatpush2.bf16.msra.mxu0 0
        %1823 = vmatprep.subr.bf16.mxu0 0
        %1824 = vmatpush2.bf16.msra.mxu0 0
        %1825 = vmatprep.subr.bf16.mxu0 0
        %1826 = vmatpush2.bf16.msra.mxu0 0
        %1827 = vmatprep.subr.bf16.mxu0 0
        %1828 = vmatpush2.bf16.msra.mxu0 0
        %1829 = vmatprep.mubr.bf16.mxu0 0
        %1830 = vmatmul.mubr.bf16.gmra.mxu0 %v1795
        %v1831 = vpop.f32.mrf.mxu0
        %v1832 = vadd.f32 0.0, %v1831
        %v1833 = vpop.f32.mrf.mxu0
        %v1834 = vpop.f32.mrf.mxu0
        %v1835 = vadd.f32 0.0, %v1834
        %v1836 = vpop.f32.mrf.mxu0
        %1837 = vdwg.mxu0
        %v1842 = vunpack.c.l.b16 %v1770
        %v1843 = vunpack.c.l.b16 %v1771
        %v1844 = vunpack.c.l.b16 %v1772
        %v1845 = vunpack.c.l.b16 %v1773
        %v1846 = vpack.c.b16 %v1843, %v1842
        %v1847 = vpack.c.b16 %v1845, %v1844
        %v1851 = vsel %vm1280, %v1763, 0
        %1853 = vmatprep.subr.bf16.mxu0 0
        %1854 = vmatpush1.bf16.msra.mxu0 0
        %1855 = vmatprep.subr.bf16.mxu0 0
        %1856 = vmatpush1.bf16.msra.mxu0 0
        %1857 = vmatprep.subr.bf16.mxu0 0
        %1858 = vmatpush1.bf16.msra.mxu0 0
        %1859 = vmatprep.subr.bf16.mxu0 0
        %1860 = vmatpush1.bf16.msra.mxu0 0
        %1861 = vmatprep.subr.bf16.mxu0 0
        %1862 = vmatpush1.bf16.msra.mxu0 0
        %1863 = vmatprep.subr.bf16.mxu0 0
        %1864 = vmatpush1.bf16.msra.mxu0 0
        %1865 = vmatprep.subr.bf16.mxu0 0
        %1866 = vmatpush1.bf16.msra.mxu0 %v1847
        %1867 = vmatprep.subr.bf16.mxu0 0
        %1868 = vmatpush1.bf16.msra.mxu0 %v1846
        %1869 = vmatprep.subr.bf16.mxu0 0
        %1870 = vmatpush2.bf16.msra.mxu0 0
        %1871 = vmatprep.subr.bf16.mxu0 0
        %1872 = vmatpush2.bf16.msra.mxu0 0
        %1873 = vmatprep.subr.bf16.mxu0 0
        %1874 = vmatpush2.bf16.msra.mxu0 0
        %1875 = vmatprep.subr.bf16.mxu0 0
        %1876 = vmatpush2.bf16.msra.mxu0 0
        %1877 = vmatprep.subr.bf16.mxu0 0
        %1878 = vmatpush2.bf16.msra.mxu0 0
        %1879 = vmatprep.subr.bf16.mxu0 0
        %1880 = vmatpush2.bf16.msra.mxu0 0
        %1881 = vmatprep.subr.bf16.mxu0 0
        %1882 = vmatpush2.bf16.msra.mxu0 0
        %1883 = vmatprep.subr.bf16.mxu0 0
        %1884 = vmatpush2.bf16.msra.mxu0 0
        %1885 = vmatprep.mubr.bf16.mxu0 0
        %1886 = vmatmul.mubr.bf16.gmra.mxu0 %v1851
        %v1887 = vpop.f32.mrf.mxu0
        %v1888 = vadd.f32 0.0, %v1887
        %v1889 = vpop.f32.mrf.mxu0
        %v1890 = vpop.f32.mrf.mxu0
        %v1891 = vadd.f32 0.0, %v1890
        %v1892 = vpop.f32.mrf.mxu0
        %1893 = vdwg.mxu0
        %v1898 = vunpack.c.l.b16 %v1774
        %v1899 = vunpack.c.l.b16 %v1775
        %v1900 = vunpack.c.l.b16 %v1776
        %v1901 = vunpack.c.l.b16 %v1777
        %v1902 = vpack.c.b16 %v1899, %v1898
        %v1903 = vpack.c.b16 %v1901, %v1900
        %v1907 = vsel %vm1280, %v1764, 0
        %1909 = vmatprep.subr.bf16.mxu0 0
        %1910 = vmatpush1.bf16.msra.mxu0 0
        %1911 = vmatprep.subr.bf16.mxu0 0
        %1912 = vmatpush1.bf16.msra.mxu0 0
        %1913 = vmatprep.subr.bf16.mxu0 0
        %1914 = vmatpush1.bf16.msra.mxu0 0
        %1915 = vmatprep.subr.bf16.mxu0 0
        %1916 = vmatpush1.bf16.msra.mxu0 0
        %1917 = vmatprep.subr.bf16.mxu0 0
        %1918 = vmatpush1.bf16.msra.mxu0 0
        %1919 = vmatprep.subr.bf16.mxu0 0
        %1920 = vmatpush1.bf16.msra.mxu0 0
        %1921 = vmatprep.subr.bf16.mxu0 0
        %1922 = vmatpush1.bf16.msra.mxu0 %v1903
        %1923 = vmatprep.subr.bf16.mxu0 0
        %1924 = vmatpush1.bf16.msra.mxu0 %v1902
        %1925 = vmatprep.subr.bf16.mxu0 0
        %1926 = vmatpush2.bf16.msra.mxu0 0
        %1927 = vmatprep.subr.bf16.mxu0 0
        %1928 = vmatpush2.bf16.msra.mxu0 0
        %1929 = vmatprep.subr.bf16.mxu0 0
        %1930 = vmatpush2.bf16.msra.mxu0 0
        %1931 = vmatprep.subr.bf16.mxu0 0
        %1932 = vmatpush2.bf16.msra.mxu0 0
        %1933 = vmatprep.subr.bf16.mxu0 0
        %1934 = vmatpush2.bf16.msra.mxu0 0
        %1935 = vmatprep.subr.bf16.mxu0 0
        %1936 = vmatpush2.bf16.msra.mxu0 0
        %1937 = vmatprep.subr.bf16.mxu0 0
        %1938 = vmatpush2.bf16.msra.mxu0 0
        %1939 = vmatprep.subr.bf16.mxu0 0
        %1940 = vmatpush2.bf16.msra.mxu0 0
        %1941 = vmatprep.mubr.bf16.mxu0 0
        %1942 = vmatmul.mubr.bf16.gmra.mxu0 %v1907
        %v1943 = vpop.f32.mrf.mxu0
        %v1944 = vadd.f32 0.0, %v1943
        %v1945 = vpop.f32.mrf.mxu0
        %v1946 = vpop.f32.mrf.mxu0
        %v1947 = vadd.f32 0.0, %v1946
        %v1948 = vpop.f32.mrf.mxu0
        %1949 = vdwg.mxu0
        %v1954 = vunpack.c.l.b16 %v1778
        %v1955 = vunpack.c.l.b16 %v1779
        %v1956 = vunpack.c.l.b16 %v1780
        %v1957 = vunpack.c.l.b16 %v1781
        %v1958 = vpack.c.b16 %v1955, %v1954
        %v1959 = vpack.c.b16 %v1957, %v1956
        %v1963 = vsel %vm1280, %v1765, 0
        %1965 = vmatprep.subr.bf16.mxu0 0
        %1966 = vmatpush1.bf16.msra.mxu0 0
        %1967 = vmatprep.subr.bf16.mxu0 0
        %1968 = vmatpush1.bf16.msra.mxu0 0
        %1969 = vmatprep.subr.bf16.mxu0 0
        %1970 = vmatpush1.bf16.msra.mxu0 0
        %1971 = vmatprep.subr.bf16.mxu0 0
        %1972 = vmatpush1.bf16.msra.mxu0 0
        %1973 = vmatprep.subr.bf16.mxu0 0
        %1974 = vmatpush1.bf16.msra.mxu0 0
        %1975 = vmatprep.subr.bf16.mxu0 0
        %1976 = vmatpush1.bf16.msra.mxu0 0
        %1977 = vmatprep.subr.bf16.mxu0 0
        %1978 = vmatpush1.bf16.msra.mxu0 %v1959
        %1979 = vmatprep.subr.bf16.mxu0 0
        %1980 = vmatpush1.bf16.msra.mxu0 %v1958
        %1981 = vmatprep.subr.bf16.mxu0 0
        %1982 = vmatpush2.bf16.msra.mxu0 0
        %1983 = vmatprep.subr.bf16.mxu0 0
        %1984 = vmatpush2.bf16.msra.mxu0 0
        %1985 = vmatprep.subr.bf16.mxu0 0
        %1986 = vmatpush2.bf16.msra.mxu0 0
        %1987 = vmatprep.subr.bf16.mxu0 0
        %1988 = vmatpush2.bf16.msra.mxu0 0
        %1989 = vmatprep.subr.bf16.mxu0 0
        %1990 = vmatpush2.bf16.msra.mxu0 0
        %1991 = vmatprep.subr.bf16.mxu0 0
        %1992 = vmatpush2.bf16.msra.mxu0 0
        %1993 = vmatprep.subr.bf16.mxu0 0
        %1994 = vmatpush2.bf16.msra.mxu0 0
        %1995 = vmatprep.subr.bf16.mxu0 0
        %1996 = vmatpush2.bf16.msra.mxu0 0
        %1997 = vmatprep.mubr.bf16.mxu0 0
        %1998 = vmatmul.mubr.bf16.gmra.mxu0 %v1963
        %v1999 = vpop.f32.mrf.mxu0
        %v2000 = vadd.f32 0.0, %v1999
        %v2001 = vpop.f32.mrf.mxu0
        %v2002 = vpop.f32.mrf.mxu0
        %v2003 = vadd.f32 0.0, %v2002
        %v2004 = vpop.f32.mrf.mxu0
        %2005 = vdwg.mxu0
        %v2006 = vld [vmem:[%s927] sm:$0x1]
        %v2007 = vadd.f32 %v1832, 0.0
        %v2008 = vadd.f32 %v1835, 0.0
        %v2009 = vadd.f32 %v2007, %v1888
        %v2010 = vadd.f32 %v2008, %v1891
        %v2011 = vadd.f32 %v2009, %v1944
        %v2012 = vadd.f32 %v2010, %v1947
        %v2013 = vadd.f32 %v2011, %v2000
        %v2014 = vadd.f32 %v2012, %v2003
        %v2016 = vlaneseq
        %v2017 = vshrl.u32 %v2016, 7
        %v2018 = vsub.s32 0, %v2017
        %v2019 = vrot.slane %v2006, %v2018
        %v2021 = vadd.f32 %v2019, %v2013
        %v2022 = vadd.f32 %v2019, %v2014
        %v2023 = vadd.f32 %v944, %v2021
        %v2024 = vadd.f32 %v945, %v2022
        %v2025 = vld [vmem:[%s930] sm:$0x1]
        %v2026 = vld [vmem:[%s766] sm:$0x1]
        %2027 = vadd.xlane.f32.xlu0 %v2023
        %v2028 = vpop.xlane.xlu0 %2027
        %2029 = vadd.xlane.f32.xlu0 %v2024
        %v2030 = vpop.xlane.xlu0 %2029
        %v2031 = vrcp.pop 128.0
        %v2032 = vmul.f32 %v2028, %v2031
        %v2033 = vmul.f32 %v2030, %v2031
        %v2034 = vsub.f32 %v2023, %v2032
        %v2035 = vsub.f32 %v2024, %v2033
        %v2036 = vmul.f32 %v2034, %v2034
        %v2037 = vmul.f32 %v2035, %v2035
        %2038 = vadd.xlane.f32.xlu0 %v2036
        %v2039 = vpop.xlane.xlu0 %2038
        %2040 = vadd.xlane.f32.xlu0 %v2037
        %v2041 = vpop.xlane.xlu0 %2040
        %v2042 = vmul.f32 %v2039, %v2031
        %v2043 = vmul.f32 %v2041, %v2031
        %v2044 = vadd.f32 %v2042, 1e-05
        %v2045 = vadd.f32 %v2043, 1e-05
        %v2046 = vrsqrt.pop %v2044
        %v2047 = vrsqrt.pop %v2045
        %v2048 = vmul.f32 %v2034, %v2046
        %v2049 = vmul.f32 %v2035, %v2047
        %v2051 = vlaneseq
        %v2052 = vshrl.u32 %v2051, 7
        %v2053 = vsub.s32 0, %v2052
        %v2054 = vrot.slane %v2025, %v2053
        %v2056 = vmul.f32 %v2048, %v2054
        %v2057 = vmul.f32 %v2049, %v2054
        %v2059 = vlaneseq
        %v2060 = vshrl.u32 %v2059, 7
        %v2061 = vsub.s32 0, %v2060
        %v2062 = vrot.slane %v2026, %v2061
        %v2064 = vadd.f32 %v2056, %v2062
        %v2065 = vadd.f32 %v2057, %v2062
        %v2066 = vpack.c.bf16 %v2065, %v2064
        %v2067 = vld [vmem:[%s775] sm:$0xff]
        %v2068 = vld [vmem:[%s775 + $0x8] sm:$0xff]
        %v2069 = vld [vmem:[%s775 + $0x10] sm:$0xff]
        %v2070 = vld [vmem:[%s775 + $0x18] sm:$0xff]
        %v2071 = vld [vmem:[%s775 + $0x20] sm:$0xff]
        %v2072 = vld [vmem:[%s775 + $0x28] sm:$0xff]
        %v2073 = vld [vmem:[%s775 + $0x30] sm:$0xff]
        %v2074 = vld [vmem:[%s775 + $0x38] sm:$0xff]
        %v2075 = vld [vmem:[%s775 + $0x40] sm:$0xff]
        %v2076 = vld [vmem:[%s775 + $0x48] sm:$0xff]
        %v2077 = vld [vmem:[%s775 + $0x50] sm:$0xff]
        %v2078 = vld [vmem:[%s775 + $0x58] sm:$0xff]
        %v2079 = vld [vmem:[%s775 + $0x60] sm:$0xff]
        %v2080 = vld [vmem:[%s775 + $0x68] sm:$0xff]
        %v2081 = vld [vmem:[%s775 + $0x70] sm:$0xff]
        %v2082 = vld [vmem:[%s775 + $0x78] sm:$0xff]
        %v2083 = vld [vmem:[%s784] sm:$0x3]
        %v2085 = vlaneseq
        %v2086 = vshrl.u32 %v2085, 7
        %v2087 = vsub.s32 0, %v2086
        %v2088 = vrot.slane %v2083, %v2087
        %v2089 = vlaneseq
        %v2090 = vshrl.u32 %v2089, 7
        %v2091 = vsub.s32 1, %v2090
        %v2092 = vrot.slane %v2083, %v2091
        %v2111 = vunpack.c.l.b16 %v2067
        %v2112 = vunpack.c.h.b16 %v2067
        %v2113 = vunpack.c.l.b16 %v2068
        %v2114 = vunpack.c.h.b16 %v2068
        %v2115 = vunpack.c.l.b16 %v2069
        %v2116 = vunpack.c.h.b16 %v2069
        %v2117 = vunpack.c.l.b16 %v2070
        %v2118 = vunpack.c.h.b16 %v2070
        %v2119 = vunpack.c.l.b16 %v2071
        %v2120 = vunpack.c.h.b16 %v2071
        %v2121 = vunpack.c.l.b16 %v2072
        %v2122 = vunpack.c.h.b16 %v2072
        %v2123 = vunpack.c.l.b16 %v2073
        %v2124 = vunpack.c.h.b16 %v2073
        %v2125 = vunpack.c.l.b16 %v2074
        %v2126 = vunpack.c.h.b16 %v2074
        %v2127 = vunpack.c.l.b16 %v2075
        %v2128 = vunpack.c.h.b16 %v2075
        %v2129 = vunpack.c.l.b16 %v2076
        %v2130 = vunpack.c.h.b16 %v2076
        %v2131 = vunpack.c.l.b16 %v2077
        %v2132 = vunpack.c.h.b16 %v2077
        %v2133 = vunpack.c.l.b16 %v2078
        %v2134 = vunpack.c.h.b16 %v2078
        %v2135 = vunpack.c.l.b16 %v2079
        %v2136 = vunpack.c.h.b16 %v2079
        %v2137 = vunpack.c.l.b16 %v2080
        %v2138 = vunpack.c.h.b16 %v2080
        %v2139 = vunpack.c.l.b16 %v2081
        %v2140 = vunpack.c.h.b16 %v2081
        %v2141 = vunpack.c.l.b16 %v2082
        %v2142 = vunpack.c.h.b16 %v2082
        %v2143 = vpack.c.b16 %v2113, %v2111
        %v2144 = vpack.c.b16 %v2114, %v2112
        %v2145 = vpack.c.b16 %v2117, %v2115
        %v2146 = vpack.c.b16 %v2118, %v2116
        %v2147 = vpack.c.b16 %v2121, %v2119
        %v2148 = vpack.c.b16 %v2122, %v2120
        %v2149 = vpack.c.b16 %v2125, %v2123
        %v2150 = vpack.c.b16 %v2126, %v2124
        %v2151 = vpack.c.b16 %v2129, %v2127
        %v2152 = vpack.c.b16 %v2130, %v2128
        %v2153 = vpack.c.b16 %v2133, %v2131
        %v2154 = vpack.c.b16 %v2134, %v2132
        %v2155 = vpack.c.b16 %v2137, %v2135
        %v2156 = vpack.c.b16 %v2138, %v2136
        %v2157 = vpack.c.b16 %v2141, %v2139
        %v2158 = vpack.c.b16 %v2142, %v2140
        %2175 = vmatprep.subr.bf16.mxu0 %v2158
        %2176 = vmatpush1.bf16.msra.mxu0 %v2157
        %2177 = vmatprep.subr.bf16.mxu0 %v2156
        %2178 = vmatpush1.bf16.msra.mxu0 %v2155
        %2179 = vmatprep.subr.bf16.mxu0 %v2154
        %2180 = vmatpush1.bf16.msra.mxu0 %v2153
        %2181 = vmatprep.subr.bf16.mxu0 %v2152
        %2182 = vmatpush1.bf16.msra.mxu0 %v2151
        %2183 = vmatprep.subr.bf16.mxu0 %v2150
        %2184 = vmatpush1.bf16.msra.mxu0 %v2149
        %2185 = vmatprep.subr.bf16.mxu0 %v2148
        %2186 = vmatpush1.bf16.msra.mxu0 %v2147
        %2187 = vmatprep.subr.bf16.mxu0 %v2146
        %2188 = vmatpush1.bf16.msra.mxu0 %v2145
        %2189 = vmatprep.subr.bf16.mxu0 %v2144
        %2190 = vmatpush1.bf16.msra.mxu0 %v2143
        %2191 = vmatprep.subr.bf16.mxu0 0
        %2192 = vmatpush2.bf16.msra.mxu0 0
        %2193 = vmatprep.subr.bf16.mxu0 0
        %2194 = vmatpush2.bf16.msra.mxu0 0
        %2195 = vmatprep.subr.bf16.mxu0 0
        %2196 = vmatpush2.bf16.msra.mxu0 0
        %2197 = vmatprep.subr.bf16.mxu0 0
        %2198 = vmatpush2.bf16.msra.mxu0 0
        %2199 = vmatprep.subr.bf16.mxu0 0
        %2200 = vmatpush2.bf16.msra.mxu0 0
        %2201 = vmatprep.subr.bf16.mxu0 0
        %2202 = vmatpush2.bf16.msra.mxu0 0
        %2203 = vmatprep.subr.bf16.mxu0 0
        %2204 = vmatpush2.bf16.msra.mxu0 0
        %2205 = vmatprep.subr.bf16.mxu0 0
        %2206 = vmatpush2.bf16.msra.mxu0 0
        %2207 = vmatprep.mubr.bf16.mxu0 0
        %2208 = vmatmul.mubr.bf16.gmra.mxu0 %v2066
        %v2209 = vpop.f32.mrf.mxu0
        %v2210 = vadd.f32 %v2088, %v2209
        %v2211 = vpop.f32.mrf.mxu0
        %v2212 = vadd.f32 %v2092, %v2211
        %v2213 = vpop.f32.mrf.mxu0
        %v2214 = vadd.f32 %v2088, %v2213
        %v2215 = vpop.f32.mrf.mxu0
        %v2216 = vadd.f32 %v2092, %v2215
        %2217 = vdwg.mxu0
        %v2218 = vmax.f32 %v2210, 0.0
        %v2219 = vmax.f32 %v2212, 0.0
        %v2220 = vmax.f32 %v2214, 0.0
        %v2221 = vmax.f32 %v2216, 0.0
        %v2222 = vpack.c.bf16 %v2220, %v2218
        %v2223 = vpack.c.bf16 %v2221, %v2219
        %v2224 = vld [vmem:[%s793] sm:$0xf]
        %v2225 = vld [vmem:[%s793 + $0x4] sm:$0xf]
        %v2226 = vld [vmem:[%s793 + $0x8] sm:$0xf]
        %v2227 = vld [vmem:[%s793 + $0xc] sm:$0xf]
        %v2228 = vld [vmem:[%s793 + $0x10] sm:$0xf]
        %v2229 = vld [vmem:[%s793 + $0x14] sm:$0xf]
        %v2230 = vld [vmem:[%s793 + $0x18] sm:$0xf]
        %v2231 = vld [vmem:[%s793 + $0x1c] sm:$0xf]
        %v2232 = vld [vmem:[%s793 + $0x20] sm:$0xf]
        %v2233 = vld [vmem:[%s793 + $0x24] sm:$0xf]
        %v2234 = vld [vmem:[%s793 + $0x28] sm:$0xf]
        %v2235 = vld [vmem:[%s793 + $0x2c] sm:$0xf]
        %v2236 = vld [vmem:[%s793 + $0x30] sm:$0xf]
        %v2237 = vld [vmem:[%s793 + $0x34] sm:$0xf]
        %v2238 = vld [vmem:[%s793 + $0x38] sm:$0xf]
        %v2239 = vld [vmem:[%s793 + $0x3c] sm:$0xf]
        %v2240 = vld [vmem:[%s793 + $0x40] sm:$0xf]
        %v2241 = vld [vmem:[%s793 + $0x44] sm:$0xf]
        %v2242 = vld [vmem:[%s793 + $0x48] sm:$0xf]
        %v2243 = vld [vmem:[%s793 + $0x4c] sm:$0xf]
        %v2244 = vld [vmem:[%s793 + $0x50] sm:$0xf]
        %v2245 = vld [vmem:[%s793 + $0x54] sm:$0xf]
        %v2246 = vld [vmem:[%s793 + $0x58] sm:$0xf]
        %v2247 = vld [vmem:[%s793 + $0x5c] sm:$0xf]
        %v2248 = vld [vmem:[%s793 + $0x60] sm:$0xf]
        %v2249 = vld [vmem:[%s793 + $0x64] sm:$0xf]
        %v2250 = vld [vmem:[%s793 + $0x68] sm:$0xf]
        %v2251 = vld [vmem:[%s793 + $0x6c] sm:$0xf]
        %v2252 = vld [vmem:[%s793 + $0x70] sm:$0xf]
        %v2253 = vld [vmem:[%s793 + $0x74] sm:$0xf]
        %v2254 = vld [vmem:[%s793 + $0x78] sm:$0xf]
        %v2255 = vld [vmem:[%s793 + $0x7c] sm:$0xf]
        %v2256 = vld [vmem:[%s801] sm:$0x1]
        %v2258 = vlaneseq
        %v2259 = vshrl.u32 %v2258, 7
        %v2260 = vsub.s32 0, %v2259
        %v2261 = vrot.slane %v2256, %v2260
        %v2295 = vunpack.c.l.b16 %v2224
        %v2296 = vunpack.c.l.b16 %v2225
        %v2297 = vunpack.c.l.b16 %v2226
        %v2298 = vunpack.c.l.b16 %v2227
        %v2299 = vunpack.c.l.b16 %v2228
        %v2300 = vunpack.c.l.b16 %v2229
        %v2301 = vunpack.c.l.b16 %v2230
        %v2302 = vunpack.c.l.b16 %v2231
        %v2303 = vunpack.c.l.b16 %v2232
        %v2304 = vunpack.c.l.b16 %v2233
        %v2305 = vunpack.c.l.b16 %v2234
        %v2306 = vunpack.c.l.b16 %v2235
        %v2307 = vunpack.c.l.b16 %v2236
        %v2308 = vunpack.c.l.b16 %v2237
        %v2309 = vunpack.c.l.b16 %v2238
        %v2310 = vunpack.c.l.b16 %v2239
        %v2311 = vunpack.c.l.b16 %v2240
        %v2312 = vunpack.c.l.b16 %v2241
        %v2313 = vunpack.c.l.b16 %v2242
        %v2314 = vunpack.c.l.b16 %v2243
        %v2315 = vunpack.c.l.b16 %v2244
        %v2316 = vunpack.c.l.b16 %v2245
        %v2317 = vunpack.c.l.b16 %v2246
        %v2318 = vunpack.c.l.b16 %v2247
        %v2319 = vunpack.c.l.b16 %v2248
        %v2320 = vunpack.c.l.b16 %v2249
        %v2321 = vunpack.c.l.b16 %v2250
        %v2322 = vunpack.c.l.b16 %v2251
        %v2323 = vunpack.c.l.b16 %v2252
        %v2324 = vunpack.c.l.b16 %v2253
        %v2325 = vunpack.c.l.b16 %v2254
        %v2326 = vunpack.c.l.b16 %v2255
        %v2327 = vpack.c.b16 %v2296, %v2295
        %v2328 = vpack.c.b16 %v2298, %v2297
        %v2329 = vpack.c.b16 %v2300, %v2299
        %v2330 = vpack.c.b16 %v2302, %v2301
        %v2331 = vpack.c.b16 %v2304, %v2303
        %v2332 = vpack.c.b16 %v2306, %v2305
        %v2333 = vpack.c.b16 %v2308, %v2307
        %v2334 = vpack.c.b16 %v2310, %v2309
        %v2335 = vpack.c.b16 %v2312, %v2311
        %v2336 = vpack.c.b16 %v2314, %v2313
        %v2337 = vpack.c.b16 %v2316, %v2315
        %v2338 = vpack.c.b16 %v2318, %v2317
        %v2339 = vpack.c.b16 %v2320, %v2319
        %v2340 = vpack.c.b16 %v2322, %v2321
        %v2341 = vpack.c.b16 %v2324, %v2323
        %v2342 = vpack.c.b16 %v2326, %v2325
        %2359 = vmatprep.subr.bf16.mxu0 0
        %2360 = vmatpush1.bf16.msra.mxu0 %v2334
        %2361 = vmatprep.subr.bf16.mxu0 0
        %2362 = vmatpush1.bf16.msra.mxu0 %v2333
        %2363 = vmatprep.subr.bf16.mxu0 0
        %2364 = vmatpush1.bf16.msra.mxu0 %v2332
        %2365 = vmatprep.subr.bf16.mxu0 0
        %2366 = vmatpush1.bf16.msra.mxu0 %v2331
        %2367 = vmatprep.subr.bf16.mxu0 0
        %2368 = vmatpush1.bf16.msra.mxu0 %v2330
        %2369 = vmatprep.subr.bf16.mxu0 0
        %2370 = vmatpush1.bf16.msra.mxu0 %v2329
        %2371 = vmatprep.subr.bf16.mxu0 0
        %2372 = vmatpush1.bf16.msra.mxu0 %v2328
        %2373 = vmatprep.subr.bf16.mxu0 0
        %2374 = vmatpush1.bf16.msra.mxu0 %v2327
        %2375 = vmatprep.subr.bf16.mxu0 0
        %2376 = vmatpush2.bf16.msra.mxu0 %v2342
        %2377 = vmatprep.subr.bf16.mxu0 0
        %2378 = vmatpush2.bf16.msra.mxu0 %v2341
        %2379 = vmatprep.subr.bf16.mxu0 0
        %2380 = vmatpush2.bf16.msra.mxu0 %v2340
        %2381 = vmatprep.subr.bf16.mxu0 0
        %2382 = vmatpush2.bf16.msra.mxu0 %v2339
        %2383 = vmatprep.subr.bf16.mxu0 0
        %2384 = vmatpush2.bf16.msra.mxu0 %v2338
        %2385 = vmatprep.subr.bf16.mxu0 0
        %2386 = vmatpush2.bf16.msra.mxu0 %v2337
        %2387 = vmatprep.subr.bf16.mxu0 0
        %2388 = vmatpush2.bf16.msra.mxu0 %v2336
        %2389 = vmatprep.subr.bf16.mxu0 0
        %2390 = vmatpush2.bf16.msra.mxu0 %v2335
        %2391 = vmatprep.mubr.bf16.mxu0 %v2223
        %2392 = vmatmul.mubr.bf16.gmra.mxu0 %v2222
        %v2393 = vpop.f32.mrf.mxu0
        %v2394 = vadd.f32 %v2261, %v2393
        %v2395 = vpop.f32.mrf.mxu0
        %v2396 = vpop.f32.mrf.mxu0
        %v2397 = vadd.f32 %v2261, %v2396
        %v2398 = vpop.f32.mrf.mxu0
        %2399 = vdwg.mxu0
        %v2400 = vadd.f32 %v2064, %v2394
        %v2401 = vadd.f32 %v2065, %v2397
        %v2402 = vld [vmem:[%s809] sm:$0x1]
        %v2403 = vld [vmem:[%s817] sm:$0x1]
        %2404 = vadd.xlane.f32.xlu0 %v2400
        %v2405 = vpop.xlane.xlu0 %2404
        %2406 = vadd.xlane.f32.xlu0 %v2401
        %v2407 = vpop.xlane.xlu0 %2406
        %v2408 = vmul.f32 %v2405, %v2031
        %v2409 = vmul.f32 %v2407, %v2031
        %v2410 = vsub.f32 %v2400, %v2408
        %v2411 = vsub.f32 %v2401, %v2409
        %v2412 = vmul.f32 %v2410, %v2410
        %v2413 = vmul.f32 %v2411, %v2411
        %2414 = vadd.xlane.f32.xlu0 %v2412
        %v2415 = vpop.xlane.xlu0 %2414
        %2416 = vadd.xlane.f32.xlu0 %v2413
        %v2417 = vpop.xlane.xlu0 %2416
        %v2418 = vmul.f32 %v2415, %v2031
        %v2419 = vmul.f32 %v2417, %v2031
        %v2420 = vadd.f32 %v2418, 1e-05
        %v2421 = vadd.f32 %v2419, 1e-05
        %v2422 = vrsqrt.pop %v2420
        %v2423 = vrsqrt.pop %v2421
        %v2424 = vmul.f32 %v2410, %v2422
        %v2425 = vmul.f32 %v2411, %v2423
        %v2427 = vlaneseq
        %v2428 = vshrl.u32 %v2427, 7
        %v2429 = vsub.s32 0, %v2428
        %v2430 = vrot.slane %v2402, %v2429
        %v2432 = vmul.f32 %v2424, %v2430
        %v2433 = vmul.f32 %v2425, %v2430
        %v2435 = vlaneseq
        %v2436 = vshrl.u32 %v2435, 7
        %v2437 = vsub.s32 0, %v2436
        %v2438 = vrot.slane %v2403, %v2437
        %v2440 = vadd.f32 %v2432, %v2438
        %v2441 = vadd.f32 %v2433, %v2438
        %2442 = vst [vmem:[#allocation2] sm:$0xff] %v2440
        %2443 = vst [vmem:[#allocation2 + $0x8] sm:$0xff] %v2441
        %p2444 = scmp.eq.s32.totalorder %s53, 1
        // Predicated region
        $region133: #{adapted_transformer_encoder.1} parent=83 // pred_check
          %p2445 = pneg %p2444
        $region134: #{adapted_transformer_encoder.1} parent=83 // pred_check_branch
          %2447 = sbr.rel (%p2445) target = $region136
        $region135: #{adapted_transformer_encoder.1} parent=83 // pred_region
          %v2448 = vld [vmem:[%s14] sm:$0x1]
          %v2449 = vld [vmem:[#allocation20] sm:$0x1]
          %2450 = vadd.xlane.f32.xlu0 %v2440
          %v2451 = vpop.xlane.xlu0 %2450
          %2452 = vadd.xlane.f32.xlu0 %v2441
          %v2453 = vpop.xlane.xlu0 %2452
          %v2454 = vmul.f32 %v2451, %v2031
          %v2455 = vmul.f32 %v2453, %v2031
          %v2456 = vsub.f32 %v2440, %v2454
          %v2457 = vsub.f32 %v2441, %v2455
          %v2458 = vmul.f32 %v2456, %v2456
          %v2459 = vmul.f32 %v2457, %v2457
          %2460 = vadd.xlane.f32.xlu0 %v2458
          %v2461 = vpop.xlane.xlu0 %2460
          %2462 = vadd.xlane.f32.xlu0 %v2459
          %v2463 = vpop.xlane.xlu0 %2462
          %v2464 = vmul.f32 %v2461, %v2031
          %v2465 = vmul.f32 %v2463, %v2031
          %v2466 = vadd.f32 %v2464, 1e-05
          %v2467 = vadd.f32 %v2465, 1e-05
          %v2468 = vrsqrt.pop %v2466
          %v2469 = vrsqrt.pop %v2467
          %v2470 = vmul.f32 %v2456, %v2468
          %v2471 = vmul.f32 %v2457, %v2469
          %v2473 = vlaneseq
          %v2474 = vshrl.u32 %v2473, 7
          %v2475 = vsub.s32 0, %v2474
          %v2476 = vrot.slane %v2448, %v2475
          %v2478 = vmul.f32 %v2470, %v2476
          %v2479 = vmul.f32 %v2471, %v2476
          %v2481 = vlaneseq
          %v2482 = vshrl.u32 %v2481, 7
          %v2483 = vsub.s32 0, %v2482
          %v2484 = vrot.slane %v2449, %v2483
          %v2486 = vadd.f32 %v2478, %v2484
          %v2487 = vadd.f32 %v2479, %v2484
          %2488 = vst [vmem:[%s920] sm:$0xff] %v2486
          %2489 = vst [vmem:[%s920 + $0x8] sm:$0xff] %v2487
        $region136: #{adapted_transformer_encoder.1} parent=83 // pred_fallthru
          _
        %s2490 = sand.u32 %s469, 1
        %s2491 = scalar_lea.sflag [#allocation5], %s2490
        %s2492 = sand.u32 %s469, 1
        %s2493 = smul.addr %s2492, 16
        %s2494 = scalar_lea.vmem [#allocation21], %s2493
        // Predicated region
        $region137: #{adapted_transformer_encoder.1} parent=83 // pred_check
          %p2495 = pneg %p479
        $region138: #{adapted_transformer_encoder.1} parent=83 // pred_check_branch
          %2497 = sbr.rel (%p2495) target = $region140
        $region139: #{adapted_transformer_encoder.1} parent=83 // pred_region
          %s2499 = ssub.s32 256, 256
          %2500 = vsyncadd %s2491, %s2499
          %s2501 = smul.addr %s52, 2
          %s2502 = smul.addr %s2501, 128
          %s2503 = scalar_lea.hbm %s16, %s2502
          %s2504 = sshll.u32 %s2494, 4
          %s2505 = int_to_ptr.vmem [resolvable:$true] %s2504
          %2510 = dma.vmem_to_hbm [thread:$0]  %s2505, 256, %s2503, %s2491, 128, 128, 8
        $region140: #{adapted_transformer_encoder.1} parent=83 // pred_fallthru
          _
      $region84: #{adapted_transformer_encoder.1} parent=5 // pred_fallthru
        _
      %p2511 = scmp.le.s32.totalorder 2, %s43
      // Predicated region
      $region141: #{adapted_transformer_encoder.1} parent=5 // pred_check
        %p2512 = pneg %p2511
      $region142: #{adapted_transformer_encoder.1} parent=5 // pred_check_branch
        %2514 = sbr.rel (%p2512) target = $region144
      $region143: #{adapted_transformer_encoder.1} parent=5 // pred_region
        %s2515 = ssub.s32 %s43, 2
        // Predicated region
        $region145: #{adapted_transformer_encoder.1} parent=143 // pred_check
          %p2516 = pneg %p485
        $region146: #{adapted_transformer_encoder.1} parent=143 // pred_check_branch
          %2518 = sbr.rel (%p2516) target = $region148
        $region147: #{adapted_transformer_encoder.1} parent=143 // pred_region
          %s2519 = sand.u32 %s470, 1
          %s2520 = scalar_lea.sflag [#allocation5], %s2519
          %s2521 = sand.u32 %s470, 1
          %s2522 = smul.addr %s2521, 16
          %s2523 = scalar_lea.vmem [#allocation21], %s2522
          %2524 = dma.done %s2520, 256
        $region148: #{adapted_transformer_encoder.1} parent=143 // pred_fallthru
          _
      $region144: #{adapted_transformer_encoder.1} parent=5 // pred_fallthru
        _
    $region6: #{adapted_transformer_encoder.1} parent=1 // loop_footer
      %s47 = sadd.s32 1, %s43
    $region7: #{adapted_transformer_encoder.1} parent=1 // loop_footer_branch
      %42 = sbr.rel target = $region3
    $region8: #{adapted_transformer_encoder.1} parent=1 // loop_exit
      _
    %2525 = vsyncpa [#allocation4], 1
    %s2526 = scalar_lea.sflag [#allocation4], 1
    %2527 = vsyncpa %s2526, 1
    %2528 = vsyncpa [#allocation7], 1
    %s2529 = scalar_lea.sflag [#allocation7], 1
    %2530 = vsyncpa %s2529, 1
    %2531 = vsyncpa [#allocation10], 1
    %s2532 = scalar_lea.sflag [#allocation10], 1
    %2533 = vsyncpa %s2532, 1
    %2534 = vsyncpa [#allocation13], 1
    %s2535 = scalar_lea.sflag [#allocation13], 1
    %2536 = vsyncpa %s2535, 1
    %2537 = vsyncpa [#allocation16], 1
    %s2538 = scalar_lea.sflag [#allocation16], 1
    %2539 = vsyncpa %s2538, 1
    %2540 = vsyncpa [#allocation19], 1
    %s2541 = scalar_lea.sflag [#allocation19], 1
    %2542 = vsyncpa %s2541, 1
    %2543 = vsyncpa [#allocation5], 1
    %s2544 = scalar_lea.sflag [#allocation5], 1
    %2545 = vsyncpa %s2544, 1

</llo_original>
